<compile_context>
chip_gen: v7x
topology: tpu7x:2x2x1
jax: 0.10.0
libtpu: 0.0.40
codegen_flags: <defaults>
</compile_context>

<pallas_src>
import math

import jax
import jax.numpy as jnp
from jax.experimental import pallas as pl
from jax.experimental.pallas import tpu as pltpu


# ---------------------------------------------------------------------------
# Helpers
# ---------------------------------------------------------------------------
def _round_up(v, m):
    return ((v + m - 1) // m) * m


def inverse_sigmoid(x, eps=1e-3):
    x = jnp.clip(x, 0.0, 1.0)
    x1 = jnp.clip(x, eps, None)
    x2 = jnp.clip(1.0 - x, eps, None)
    return jnp.log(x1 / x2)


def gen_sineembed_for_position(pos_tensor):
    """JAX port of the torch helper (128 frequencies per coordinate)."""
    scale = 2.0 * math.pi
    dim_t = jnp.arange(128, dtype=jnp.float32)
    dim_t = 10000.0 ** (2.0 * jnp.floor(dim_t / 2.0) / 128.0)

    def embed(coord):  # coord: [nq, bs]
        p = coord[:, :, None] * scale / dim_t  # [nq, bs, 128]
        out = jnp.stack((jnp.sin(p[:, :, 0::2]), jnp.cos(p[:, :, 1::2])), axis=3)
        return out.reshape(p.shape[0], p.shape[1], -1)  # [nq, bs, 128]

    pos_x = embed(pos_tensor[:, :, 0])
    pos_y = embed(pos_tensor[:, :, 1])
    if pos_tensor.shape[-1] == 2:
        return jnp.concatenate((pos_y, pos_x), axis=2)
    elif pos_tensor.shape[-1] == 4:
        pos_w = embed(pos_tensor[:, :, 2])
        pos_h = embed(pos_tensor[:, :, 3])
        return jnp.concatenate((pos_y, pos_x, pos_w, pos_h), axis=2)
    raise ValueError(f"Unknown pos_tensor shape(-1): {pos_tensor.shape[-1]}")


# ---------------------------------------------------------------------------
# Kernel: all MLP heads of one decoder iteration, fused.
# ---------------------------------------------------------------------------
def _make_fused_heads_kernel(plan, n_inputs, compute_dtype):
    """plan: tuple of (input_idx, num_layers, out_offset, out_seg) per head.

    Kernel refs layout: (x_0 .. x_{n_inputs-1}, w0, b0, w1, b1, ..., o_ref).
    Weight/bias refs are whole (full-block, constant index_map) and stay
    VMEM-resident for all grid steps.
    """

    def kernel(*refs):
        o_ref = refs[-1]
        x_refs = refs[:n_inputs]
        wb = refs[n_inputs:-1]

        xs = [r[...].astype(compute_dtype) for r in x_refs]

        p = 0
        for (inp_idx, n_layers, off, seg) in plan:
            h = xs[inp_idx]
            for li in range(n_layers):  # static unroll over the head's layers
                w = wb[p][...]
                b = wb[p + 1][...]
                p += 2
                y = jnp.dot(h, w, preferred_element_type=jnp.float32)
                y = y + b.astype(jnp.float32)
                if li < n_layers - 1:
                    y = jnp.maximum(y, 0.0).astype(compute_dtype)
                h = y
            # Lane-aligned, 128-multiple-wide store into the packed output.
            o_ref[:, off:off + seg] = h.astype(o_ref.dtype)

    return kernel


# ---------------------------------------------------------------------------
# Wrapper
# ---------------------------------------------------------------------------
def fused_mlp_heads(inputs, heads_params, head_inputs, *, block_m=512,
                    compute_dtype=jnp.float32, out_dtype=None):
    """Run several DETR-style MLP heads in one pallas_call.

    inputs:       list of arrays, each [..., D_i], identical leading dims.
    heads_params: list over heads; each head is a list of (w [n_in,n_out],
                  b [1,n_out]) Linear layers (ReLU after all but the last,
                  matching MLP.forward).
    head_inputs:  per-head index into `inputs`.
    Returns one array per head with the original leading dims.
    """
    LANE = 128
    assert len(heads_params) == len(head_inputs)
    n_inputs = len(inputs)
    for idx in head_inputs:
        assert 0 <= idx < n_inputs
    lead_shape = inputs[0].shape[:-1]
    for x in inputs:
        assert x.shape[:-1] == lead_shape
    if out_dtype is None:
        out_dtype = inputs[0].dtype

    M = 1
    for d in lead_shape:
        M *= d

    # Row tiling only; feature dims stay unpadded (full-dim blocks are exempt
    # from the (8,128) rule), so no host-side lane pad / extra HBM traffic.
    assert block_m % 8 == 0
    TM = min(block_m, _round_up(M, 8))
    Mp = _round_up(M, TM)
    x2ds = [jnp.pad(x.reshape(M, x.shape[-1]), ((0, Mp - M), (0, 0)))
            for x in inputs]

    in_specs = [pl.BlockSpec((TM, x.shape[-1]), lambda i: (i, 0)) for x in x2ds]

    # Pack & pad head weights.  Only each head's LAST layer is padded along N
    # (to a 128-lane segment) so every output store is dense and aligned; all
    # weights are cast once on the host (halves weight DMA for bf16).
    flat_wb, plan, head_info = [], [], []
    off = 0
    flops = 0
    for params, inp_idx in zip(heads_params, head_inputs):
        n_layers = len(params)
        out_dim = params[-1][0].shape[1]
        seg = _round_up(out_dim, LANE)
        for li, (w, b) in enumerate(params):
            n_in, n_out = w.shape
            n_out_p = seg if li == n_layers - 1 else n_out
            w_p = jnp.pad(w, ((0, 0), (0, n_out_p - n_out))).astype(compute_dtype)
            b_p = jnp.pad(b.reshape(1, -1), ((0, 0), (0, n_out_p - n_out))).astype(compute_dtype)
            flat_wb += [w_p, b_p]
            # Constant index_map -> fetched once, VMEM-resident across grid.
            in_specs.append(pl.BlockSpec(w_p.shape, lambda i: (0, 0)))
            in_specs.append(pl.BlockSpec(b_p.shape, lambda i: (0, 0)))
            flops += 2 * Mp * n_in * n_out_p
        plan.append((inp_idx, n_layers, off, seg))
        head_info.append((off, out_dim))
        off += seg
    Np = off

    out_itemsize = jnp.dtype(out_dtype).itemsize
    x_tile_bytes = sum(TM * x.shape[-1] * x.dtype.itemsize for x in x2ds)
    w_bytes = sum(int(a.size) * a.dtype.itemsize for a in flat_wb)
    out_tile_bytes = TM * Np * out_itemsize
    # Double-buffered footprint + headroom for in-kernel temporaries.
    vmem_limit = max(int(2 * (x_tile_bytes + w_bytes + out_tile_bytes)) + (4 << 20),
                     8 << 20)

    bytes_accessed = (sum(int(x.size) * x.dtype.itemsize for x in x2ds)
                      + w_bytes + Mp * Np * out_itemsize)

    kernel = _make_fused_heads_kernel(tuple(plan), n_inputs, compute_dtype)

    out_pad = pl.pallas_call(
        kernel,
        out_shape=jax.ShapeDtypeStruct((Mp, Np), out_dtype),
        grid=(Mp // TM,),
        in_specs=in_specs,
        out_specs=pl.BlockSpec((TM, Np), lambda i: (i, 0)),
        compiler_params=pltpu.CompilerParams(
            dimension_semantics=("parallel",),   # shards rows across v7x's 2 TCs
            vmem_limit_bytes=vmem_limit,
        ),
        cost_estimate=pl.CostEstimate(
            flops=flops, transcendentals=0, bytes_accessed=bytes_accessed),
    )(*x2ds, *flat_wb)

    outs = []
    for (o, d) in head_info:
        outs.append(out_pad[:M, o:o + d].reshape(*lead_shape, d))
    return outs


# ---------------------------------------------------------------------------
# Params & plain-JAX reference
# ---------------------------------------------------------------------------
def init_mlp_params(key, input_dim, hidden_dim, output_dim, num_layers):
    """Matches torch.nn.Linear default init (U(-1/sqrt(fan_in), 1/sqrt(fan_in)))."""
    h = [hidden_dim] * (num_layers - 1)
    dims_in = [input_dim] + h
    dims_out = h + [output_dim]
    params = []
    for n_in, n_out in zip(dims_in, dims_out):
        key, kw, kb = jax.random.split(key, 3)
        bound = 1.0 / (n_in ** 0.5)
        w = jax.random.uniform(kw, (n_in, n_out), jnp.float32, -bound, bound)
        b = jax.random.uniform(kb, (1, n_out), jnp.float32, -bound, bound)
        params.append((w, b))
    return params


def mlp_forward_ref(x, params):
    num_layers = len(params)
    h = x
    for i, (w, b) in enumerate(params):
        h = jnp.dot(h, w, precision=jax.lax.Precision.HIGHEST) + b.reshape(-1)
        if i < num_layers - 1:
            h = jnp.maximum(h, 0.0)
    return h


# ---------------------------------------------------------------------------
if __name__ == "__main__":
    # Module defaults: d_model=256 (the sine embedding is hard-coded to
    # 128 freqs/coordinate, so query_dim//2*d_model == 256), query_dim=2.
    d_model = 256
    num_queries, batch, query_dim = 8, 2, 2

    key = jax.random.PRNGKey(0)
    key, k_ref, k_out, k1, k2, k3 = jax.random.split(key, 6)

    # reference points -> sigmoid -> sine embedding (plain JAX, as in forward())
    refpoints_unsigmoid = jax.random.normal(
        k_ref, (num_queries, batch, query_dim), jnp.float32)
    reference_points = jax.nn.sigmoid(refpoints_unsigmoid)
    query_sine_embed = gen_sineembed_for_position(
        reference_points[..., :query_dim])            # [nq, bs, 256]

    # Stand-in for the decoder_layer output (external attention layer not in spec).
    output = jax.random.normal(k_out, (num_queries, batch, d_model), jnp.float32)

    # Heads exactly as constructed by TransformerCascadeDecoder:
    rp_params = init_mlp_params(k1, query_dim // 2 * d_model, d_model, d_model, 2)  # ref_point_head
    qs_params = init_mlp_params(k2, d_model, d_model, d_model, 2)                   # query_scale (cond_elewise)
    bb_params = init_mlp_params(k3, d_model, d_model, 4, 3)                         # bbox_embed
    heads_params = [rp_params, qs_params, bb_params]
    head_inputs = (0, 1, 1)   # ref_point_head <- query_sine_embed; others <- output
    # (ref_anchor_head / cond_scalar variants are just extra entries in this list.)

    # float32 path (matches the torch module's numerics)
    query_pos, pos_transformation, bbox_delta = fused_mlp_heads(
        [query_sine_embed, output], heads_params, head_inputs,
        compute_dtype=jnp.float32)
    jax.block_until_ready(bbox_delta)

    ref_qp = mlp_forward_ref(query_sine_embed, rp_params)
    ref_pt = mlp_forward_ref(output, qs_params)
    ref_bb = mlp_forward_ref(output, bb_params)

    assert query_pos.shape == (num_queries, batch, d_model)
    assert pos_transformation.shape == (num_queries, batch, d_model)
    assert bbox_delta.shape == (num_queries, batch, 4)
    assert jnp.allclose(query_pos, ref_qp, atol=1e-3, rtol=1e-3), "ref_point_head mismatch"
    assert jnp.allclose(pos_transformation, ref_pt, atol=1e-3, rtol=1e-3), "query_scale mismatch"
    assert jnp.allclose(bbox_delta, ref_bb, atol=1e-3, rtol=1e-3), "bbox_embed mismatch"

    # bfloat16-operand path (f32 accumulation) for v6e/v7x MXU throughput.
    qp16, pt16, bb16 = fused_mlp_heads(
        [query_sine_embed, output], heads_params, head_inputs,
        compute_dtype=jnp.bfloat16)
    jax.block_until_ready(bb16)
    assert jnp.allclose(qp16, ref_qp, atol=7e-2, rtol=7e-2), "bf16 ref_point_head drift"
    assert jnp.allclose(pt16, ref_pt, atol=7e-2, rtol=7e-2), "bf16 query_scale drift"
    assert jnp.allclose(bb16, ref_bb, atol=7e-2, rtol=7e-2), "bf16 bbox_embed drift"

    # Downstream plain-JAX glue as in TransformerCascadeDecoder.forward
    # (layer_id > 0 branch; the external decoder_layer call itself is a TODO).
    query_sine_embed_scaled = query_sine_embed[..., :d_model] * pos_transformation
    tmp = bbox_delta.at[..., :query_dim].add(inverse_sigmoid(reference_points))
    new_reference_points = jax.nn.sigmoid(tmp[..., :query_dim])
    jax.block_until_ready(new_reference_points)
    assert query_sine_embed_scaled.shape == (num_queries, batch, d_model)
    assert new_reference_points.shape == (num_queries, batch, query_dim)

    print("KERNEL_OK")
</pallas_src>

<mosaic_0001>
module attributes {stable_mosaic.version = 11 : i64} {
  func.func @kernel(%arg0: i32, %arg1: memref<16x256xf32, #tpu.memory_space<vmem>>, %arg2: memref<16x256xf32, #tpu.memory_space<vmem>>, %arg3: memref<256x256xf32, #tpu.memory_space<vmem>>, %arg4: memref<1x256xf32, #tpu.memory_space<vmem>>, %arg5: memref<256x256xf32, #tpu.memory_space<vmem>>, %arg6: memref<1x256xf32, #tpu.memory_space<vmem>>, %arg7: memref<256x256xf32, #tpu.memory_space<vmem>>, %arg8: memref<1x256xf32, #tpu.memory_space<vmem>>, %arg9: memref<256x256xf32, #tpu.memory_space<vmem>>, %arg10: memref<1x256xf32, #tpu.memory_space<vmem>>, %arg11: memref<256x256xf32, #tpu.memory_space<vmem>>, %arg12: memref<1x256xf32, #tpu.memory_space<vmem>>, %arg13: memref<256x256xf32, #tpu.memory_space<vmem>>, %arg14: memref<1x256xf32, #tpu.memory_space<vmem>>, %arg15: memref<256x128xf32, #tpu.memory_space<vmem>>, %arg16: memref<1x128xf32, #tpu.memory_space<vmem>>, %arg17: memref<16x640xf32, #tpu.memory_space<vmem>>) attributes {dimension_semantics = [#tpu.dimension_semantics<parallel>], iteration_bounds = array<i64: 1>, scalar_prefetch = 0 : i64, scratch_operands = 0 : i64, tpu.core_type = #tpu.core_type<tc>, window_params = [{transform_indices = @transform_0, window_bounds = array<i64: 16, 256>}, {transform_indices = @transform_1, window_bounds = array<i64: 16, 256>}, {pipeline_mode = #tpu.pipeline_mode<synchronous>, transform_indices = @transform_2, window_bounds = array<i64: 256, 256>}, {pipeline_mode = #tpu.pipeline_mode<synchronous>, transform_indices = @transform_3, window_bounds = array<i64: 1, 256>}, {pipeline_mode = #tpu.pipeline_mode<synchronous>, transform_indices = @transform_4, window_bounds = array<i64: 256, 256>}, {pipeline_mode = #tpu.pipeline_mode<synchronous>, transform_indices = @transform_5, window_bounds = array<i64: 1, 256>}, {pipeline_mode = #tpu.pipeline_mode<synchronous>, transform_indices = @transform_6, window_bounds = array<i64: 256, 256>}, {pipeline_mode = #tpu.pipeline_mode<synchronous>, transform_indices = @transform_7, window_bounds = array<i64: 1, 256>}, {pipeline_mode = #tpu.pipeline_mode<synchronous>, transform_indices = @transform_8, window_bounds = array<i64: 256, 256>}, {pipeline_mode = #tpu.pipeline_mode<synchronous>, transform_indices = @transform_9, window_bounds = array<i64: 1, 256>}, {pipeline_mode = #tpu.pipeline_mode<synchronous>, transform_indices = @transform_10, window_bounds = array<i64: 256, 256>}, {pipeline_mode = #tpu.pipeline_mode<synchronous>, transform_indices = @transform_11, window_bounds = array<i64: 1, 256>}, {pipeline_mode = #tpu.pipeline_mode<synchronous>, transform_indices = @transform_12, window_bounds = array<i64: 256, 256>}, {pipeline_mode = #tpu.pipeline_mode<synchronous>, transform_indices = @transform_13, window_bounds = array<i64: 1, 256>}, {pipeline_mode = #tpu.pipeline_mode<synchronous>, transform_indices = @transform_14, window_bounds = array<i64: 256, 128>}, {pipeline_mode = #tpu.pipeline_mode<synchronous>, transform_indices = @transform_15, window_bounds = array<i64: 1, 128>}, {transform_indices = @transform_16, window_bounds = array<i64: 16, 640>}]} {
    %c0 = arith.constant 0 : index
    %c0_0 = arith.constant 0 : index
    %0 = vector.load %arg1[%c0, %c0_0] : memref<16x256xf32, #tpu.memory_space<vmem>>, vector<16x256xf32>
    %c0_1 = arith.constant 0 : index
    %c0_2 = arith.constant 0 : index
    %1 = vector.load %arg2[%c0_1, %c0_2] : memref<16x256xf32, #tpu.memory_space<vmem>>, vector<16x256xf32>
    %c0_3 = arith.constant 0 : index
    %c0_4 = arith.constant 0 : index
    %2 = vector.load %arg3[%c0_3, %c0_4] : memref<256x256xf32, #tpu.memory_space<vmem>>, vector<256x256xf32>
    %c0_5 = arith.constant 0 : index
    %c0_6 = arith.constant 0 : index
    %3 = vector.load %arg4[%c0_5, %c0_6] : memref<1x256xf32, #tpu.memory_space<vmem>>, vector<1x256xf32>
    %cst = arith.constant dense<0.000000e+00> : vector<16x256xf32>
    %4 = tpu.matmul %0, %2, %cst {dimension_numbers = #tpu.dot_dimension_numbers<[1], [0], [0], [1], [0, 0, 1, 1], [], []>} : vector<16x256xf32>, vector<256x256xf32>, vector<16x256xf32> -> vector<16x256xf32>
    %5 = vector.broadcast %3 : vector<1x256xf32> to vector<16x256xf32>
    %6 = arith.addf %4, %5 : vector<16x256xf32>
    %cst_7 = arith.constant 0.000000e+00 : f32
    %7 = vector.broadcast %cst_7 : f32 to vector<16x256xf32>
    %8 = arith.maximumf %6, %7 : vector<16x256xf32>
    %c0_8 = arith.constant 0 : index
    %c0_9 = arith.constant 0 : index
    %9 = vector.load %arg5[%c0_8, %c0_9] : memref<256x256xf32, #tpu.memory_space<vmem>>, vector<256x256xf32>
    %c0_10 = arith.constant 0 : index
    %c0_11 = arith.constant 0 : index
    %10 = vector.load %arg6[%c0_10, %c0_11] : memref<1x256xf32, #tpu.memory_space<vmem>>, vector<1x256xf32>
    %cst_12 = arith.constant dense<0.000000e+00> : vector<16x256xf32>
    %11 = tpu.matmul %8, %9, %cst_12 {dimension_numbers = #tpu.dot_dimension_numbers<[1], [0], [0], [1], [0, 0, 1, 1], [], []>} : vector<16x256xf32>, vector<256x256xf32>, vector<16x256xf32> -> vector<16x256xf32>
    %12 = vector.broadcast %10 : vector<1x256xf32> to vector<16x256xf32>
    %13 = arith.addf %11, %12 : vector<16x256xf32>
    %c0_13 = arith.constant 0 : index
    %c0_14 = arith.constant 0 : index
    %14 = vector.load %arg17[%c0_13, %c0_14] : memref<16x640xf32, #tpu.memory_space<vmem>>, vector<16x256xf32>
    tpu.vector_store %arg17[%c0_13, %c0_14], %13 {strides = array<i32>} : memref<16x640xf32, #tpu.memory_space<vmem>>, vector<16x256xf32>,
    %c0_15 = arith.constant 0 : index
    %c0_16 = arith.constant 0 : index
    %15 = vector.load %arg7[%c0_15, %c0_16] : memref<256x256xf32, #tpu.memory_space<vmem>>, vector<256x256xf32>
    %c0_17 = arith.constant 0 : index
    %c0_18 = arith.constant 0 : index
    %16 = vector.load %arg8[%c0_17, %c0_18] : memref<1x256xf32, #tpu.memory_space<vmem>>, vector<1x256xf32>
    %cst_19 = arith.constant dense<0.000000e+00> : vector<16x256xf32>
    %17 = tpu.matmul %1, %15, %cst_19 {dimension_numbers = #tpu.dot_dimension_numbers<[1], [0], [0], [1], [0, 0, 1, 1], [], []>} : vector<16x256xf32>, vector<256x256xf32>, vector<16x256xf32> -> vector<16x256xf32>
    %18 = vector.broadcast %16 : vector<1x256xf32> to vector<16x256xf32>
    %19 = arith.addf %17, %18 : vector<16x256xf32>
    %cst_20 = arith.constant 0.000000e+00 : f32
    %20 = vector.broadcast %cst_20 : f32 to vector<16x256xf32>
    %21 = arith.maximumf %19, %20 : vector<16x256xf32>
    %c0_21 = arith.constant 0 : index
    %c0_22 = arith.constant 0 : index
    %22 = vector.load %arg9[%c0_21, %c0_22] : memref<256x256xf32, #tpu.memory_space<vmem>>, vector<256x256xf32>
    %c0_23 = arith.constant 0 : index
    %c0_24 = arith.constant 0 : index
    %23 = vector.load %arg10[%c0_23, %c0_24] : memref<1x256xf32, #tpu.memory_space<vmem>>, vector<1x256xf32>
    %cst_25 = arith.constant dense<0.000000e+00> : vector<16x256xf32>
    %24 = tpu.matmul %21, %22, %cst_25 {dimension_numbers = #tpu.dot_dimension_numbers<[1], [0], [0], [1], [0, 0, 1, 1], [], []>} : vector<16x256xf32>, vector<256x256xf32>, vector<16x256xf32> -> vector<16x256xf32>
    %25 = vector.broadcast %23 : vector<1x256xf32> to vector<16x256xf32>
    %26 = arith.addf %24, %25 : vector<16x256xf32>
    %c0_26 = arith.constant 0 : index
    %c256 = arith.constant 256 : index
    %27 = vector.load %arg17[%c0_26, %c256] : memref<16x640xf32, #tpu.memory_space<vmem>>, vector<16x256xf32>
    tpu.vector_store %arg17[%c0_26, %c256], %26 {strides = array<i32>} : memref<16x640xf32, #tpu.memory_space<vmem>>, vector<16x256xf32>,
    %c0_27 = arith.constant 0 : index
    %c0_28 = arith.constant 0 : index
    %28 = vector.load %arg11[%c0_27, %c0_28] : memref<256x256xf32, #tpu.memory_space<vmem>>, vector<256x256xf32>
    %c0_29 = arith.constant 0 : index
    %c0_30 = arith.constant 0 : index
    %29 = vector.load %arg12[%c0_29, %c0_30] : memref<1x256xf32, #tpu.memory_space<vmem>>, vector<1x256xf32>
    %cst_31 = arith.constant dense<0.000000e+00> : vector<16x256xf32>
    %30 = tpu.matmul %1, %28, %cst_31 {dimension_numbers = #tpu.dot_dimension_numbers<[1], [0], [0], [1], [0, 0, 1, 1], [], []>} : vector<16x256xf32>, vector<256x256xf32>, vector<16x256xf32> -> vector<16x256xf32>
    %31 = vector.broadcast %29 : vector<1x256xf32> to vector<16x256xf32>
    %32 = arith.addf %30, %31 : vector<16x256xf32>
    %cst_32 = arith.constant 0.000000e+00 : f32
    %33 = vector.broadcast %cst_32 : f32 to vector<16x256xf32>
    %34 = arith.maximumf %32, %33 : vector<16x256xf32>
    %c0_33 = arith.constant 0 : index
    %c0_34 = arith.constant 0 : index
    %35 = vector.load %arg13[%c0_33, %c0_34] : memref<256x256xf32, #tpu.memory_space<vmem>>, vector<256x256xf32>
    %c0_35 = arith.constant 0 : index
    %c0_36 = arith.constant 0 : index
    %36 = vector.load %arg14[%c0_35, %c0_36] : memref<1x256xf32, #tpu.memory_space<vmem>>, vector<1x256xf32>
    %cst_37 = arith.constant dense<0.000000e+00> : vector<16x256xf32>
    %37 = tpu.matmul %34, %35, %cst_37 {dimension_numbers = #tpu.dot_dimension_numbers<[1], [0], [0], [1], [0, 0, 1, 1], [], []>} : vector<16x256xf32>, vector<256x256xf32>, vector<16x256xf32> -> vector<16x256xf32>
    %38 = vector.broadcast %36 : vector<1x256xf32> to vector<16x256xf32>
    %39 = arith.addf %37, %38 : vector<16x256xf32>
    %cst_38 = arith.constant 0.000000e+00 : f32
    %40 = vector.broadcast %cst_38 : f32 to vector<16x256xf32>
    %41 = arith.maximumf %39, %40 : vector<16x256xf32>
    %c0_39 = arith.constant 0 : index
    %c0_40 = arith.constant 0 : index
    %42 = vector.load %arg15[%c0_39, %c0_40] : memref<256x128xf32, #tpu.memory_space<vmem>>, vector<256x128xf32>
    %c0_41 = arith.constant 0 : index
    %c0_42 = arith.constant 0 : index
    %43 = vector.load %arg16[%c0_41, %c0_42] : memref<1x128xf32, #tpu.memory_space<vmem>>, vector<1x128xf32>
    %cst_43 = arith.constant dense<0.000000e+00> : vector<16x128xf32>
    %44 = tpu.matmul %41, %42, %cst_43 {dimension_numbers = #tpu.dot_dimension_numbers<[1], [0], [0], [1], [0, 0, 1, 1], [], []>} : vector<16x256xf32>, vector<256x128xf32>, vector<16x128xf32> -> vector<16x128xf32>
    %45 = vector.broadcast %43 : vector<1x128xf32> to vector<16x128xf32>
    %46 = arith.addf %44, %45 : vector<16x128xf32>
    %c0_44 = arith.constant 0 : index
    %c512 = arith.constant 512 : index
    %47 = vector.load %arg17[%c0_44, %c512] : memref<16x640xf32, #tpu.memory_space<vmem>>, vector<16x128xf32>
    tpu.vector_store %arg17[%c0_44, %c512], %46 {strides = array<i32>} : memref<16x640xf32, #tpu.memory_space<vmem>>, vector<16x128xf32>,
    return
  }
  func.func @transform_0(%arg0: i32) -> (i32, i32) {
    %c0_i32 = arith.constant 0 : i32
    %c0_i32_0 = arith.constant 0 : i32
    return %arg0, %c0_i32 : i32, i32
  }
  func.func @transform_1(%arg0: i32) -> (i32, i32) {
    %c0_i32 = arith.constant 0 : i32
    %c0_i32_0 = arith.constant 0 : i32
    return %arg0, %c0_i32 : i32, i32
  }
  func.func @transform_2(%arg0: i32) -> (i32, i32) {
    %c0_i32 = arith.constant 0 : i32
    %c0_i32_0 = arith.constant 0 : i32
    %c0_i32_1 = arith.constant 0 : i32
    return %c0_i32, %c0_i32_0 : i32, i32
  }
  func.func @transform_3(%arg0: i32) -> (i32, i32) {
    %c0_i32 = arith.constant 0 : i32
    %c0_i32_0 = arith.constant 0 : i32
    %c0_i32_1 = arith.constant 0 : i32
    return %c0_i32, %c0_i32_0 : i32, i32
  }
  func.func @transform_4(%arg0: i32) -> (i32, i32) {
    %c0_i32 = arith.constant 0 : i32
    %c0_i32_0 = arith.constant 0 : i32
    %c0_i32_1 = arith.constant 0 : i32
    return %c0_i32, %c0_i32_0 : i32, i32
  }
  func.func @transform_5(%arg0: i32) -> (i32, i32) {
    %c0_i32 = arith.constant 0 : i32
    %c0_i32_0 = arith.constant 0 : i32
    %c0_i32_1 = arith.constant 0 : i32
    return %c0_i32, %c0_i32_0 : i32, i32
  }
  func.func @transform_6(%arg0: i32) -> (i32, i32) {
    %c0_i32 = arith.constant 0 : i32
    %c0_i32_0 = arith.constant 0 : i32
    %c0_i32_1 = arith.constant 0 : i32
    return %c0_i32, %c0_i32_0 : i32, i32
  }
  func.func @transform_7(%arg0: i32) -> (i32, i32) {
    %c0_i32 = arith.constant 0 : i32
    %c0_i32_0 = arith.constant 0 : i32
    %c0_i32_1 = arith.constant 0 : i32
    return %c0_i32, %c0_i32_0 : i32, i32
  }
  func.func @transform_8(%arg0: i32) -> (i32, i32) {
    %c0_i32 = arith.constant 0 : i32
    %c0_i32_0 = arith.constant 0 : i32
    %c0_i32_1 = arith.constant 0 : i32
    return %c0_i32, %c0_i32_0 : i32, i32
  }
  func.func @transform_9(%arg0: i32) -> (i32, i32) {
    %c0_i32 = arith.constant 0 : i32
    %c0_i32_0 = arith.constant 0 : i32
    %c0_i32_1 = arith.constant 0 : i32
    return %c0_i32, %c0_i32_0 : i32, i32
  }
  func.func @transform_10(%arg0: i32) -> (i32, i32) {
    %c0_i32 = arith.constant 0 : i32
    %c0_i32_0 = arith.constant 0 : i32
    %c0_i32_1 = arith.constant 0 : i32
    return %c0_i32, %c0_i32_0 : i32, i32
  }
  func.func @transform_11(%arg0: i32) -> (i32, i32) {
    %c0_i32 = arith.constant 0 : i32
    %c0_i32_0 = arith.constant 0 : i32
    %c0_i32_1 = arith.constant 0 : i32
    return %c0_i32, %c0_i32_0 : i32, i32
  }
  func.func @transform_12(%arg0: i32) -> (i32, i32) {
    %c0_i32 = arith.constant 0 : i32
    %c0_i32_0 = arith.constant 0 : i32
    %c0_i32_1 = arith.constant 0 : i32
    return %c0_i32, %c0_i32_0 : i32, i32
  }
  func.func @transform_13(%arg0: i32) -> (i32, i32) {
    %c0_i32 = arith.constant 0 : i32
    %c0_i32_0 = arith.constant 0 : i32
    %c0_i32_1 = arith.constant 0 : i32
    return %c0_i32, %c0_i32_0 : i32, i32
  }
  func.func @transform_14(%arg0: i32) -> (i32, i32) {
    %c0_i32 = arith.constant 0 : i32
    %c0_i32_0 = arith.constant 0 : i32
    %c0_i32_1 = arith.constant 0 : i32
    return %c0_i32, %c0_i32_0 : i32, i32
  }
  func.func @transform_15(%arg0: i32) -> (i32, i32) {
    %c0_i32 = arith.constant 0 : i32
    %c0_i32_0 = arith.constant 0 : i32
    %c0_i32_1 = arith.constant 0 : i32
    return %c0_i32, %c0_i32_0 : i32, i32
  }
  func.func @transform_16(%arg0: i32) -> (i32, i32) {
    %c0_i32 = arith.constant 0 : i32
    %c0_i32_0 = arith.constant 0 : i32
    return %arg0, %c0_i32 : i32, i32
  }
}

</mosaic_0001>

<llo_original>
// kernel: tpu_custom_call.1
$region0: #{tpu_custom_call.1}
  #allocation0 [shape = 'u32[]', space=smem, size = 0x4, offset = 0x4, fixed_abs, tag = 'smem constant byte address 0x4 - core index']
  #allocation1 [shape = 'u32[144,128]{1,0:T(1,128)}', space=vmem, size = 0x12000, scoped, tag = 'internal scratch']
  %s0 = inlined_call_operand.hbm [shape: f32[16,256], index: 0, kind: input, shape index: {}]
  %s1 = inlined_call_operand.hbm [shape: f32[16,256], index: 1, kind: input, shape index: {}]
  %s2 = inlined_call_operand.hbm [shape: f32[256,256], index: 2, kind: input, shape index: {}]
  %s3 = inlined_call_operand.vmem [shape: f32[1,256], index: 3, kind: input, shape index: {}]
  %s4 = inlined_call_operand.hbm [shape: f32[256,256], index: 4, kind: input, shape index: {}]
  %s5 = inlined_call_operand.vmem [shape: f32[1,256], index: 5, kind: input, shape index: {}]
  %s6 = inlined_call_operand.hbm [shape: f32[256,256], index: 6, kind: input, shape index: {}]
  %s7 = inlined_call_operand.vmem [shape: f32[1,256], index: 7, kind: input, shape index: {}]
  %s8 = inlined_call_operand.hbm [shape: f32[256,256], index: 8, kind: input, shape index: {}]
  %s9 = inlined_call_operand.vmem [shape: f32[1,256], index: 9, kind: input, shape index: {}]
  %s10 = inlined_call_operand.hbm [shape: f32[256,256], index: 10, kind: input, shape index: {}]
  %s11 = inlined_call_operand.vmem [shape: f32[1,256], index: 11, kind: input, shape index: {}]
  %s12 = inlined_call_operand.hbm [shape: f32[256,256], index: 12, kind: input, shape index: {}]
  %s13 = inlined_call_operand.vmem [shape: f32[1,256], index: 13, kind: input, shape index: {}]
  %s14 = inlined_call_operand.hbm [shape: f32[256,128], index: 14, kind: input, shape index: {}]
  %s15 = inlined_call_operand.vmem [shape: f32[1,128], index: 15, kind: input, shape index: {}]
  %s16 = inlined_call_operand.hbm [shape: f32[16,640], index: 16, kind: output, shape index: {}]
  %s17 = sld [smem:[#allocation0]]
  $region110: #{tpu_custom_call.1} parent=0
    _
  %s19 = ssub.s32 1, %s17
  %s20 = scalar_select 0, %s19, %s17
  $region1: #{tpu_custom_call.1} parent=0
    #allocation2 [shape = 'u8[16384]{0}', space=vmem, size = 0x4000, scoped, tag = 'input window, operand 0, single buffered']
    #allocation3 [shape = 's32[1]{0}', space=sflag, size = 0x4, scoped, tag = 'scoped memory for tpu_custom_call.1']
    #allocation4 [shape = 's32[1]{0}', space=sflag, size = 0x4, scoped, tag = 'scoped memory for tpu_custom_call.1']
    #allocation5 [shape = 'u8[16384]{0}', space=vmem, size = 0x4000, scoped, tag = 'input window, operand 1, single buffered']
    #allocation6 [shape = 's32[1]{0}', space=sflag, size = 0x4, scoped, tag = 'scoped memory for tpu_custom_call.1']
    #allocation7 [shape = 'u8[262144]{0}', space=vmem, size = 0x40000, scoped, tag = 'input window, operand 2, single buffered']
    #allocation8 [shape = 'u8[262144]{0}', space=vmem, size = 0x40000, scoped, tag = 'input window, operand 4, single buffered']
    #allocation9 [shape = 's32[1]{0}', space=sflag, size = 0x4, scoped, tag = 'scoped memory for tpu_custom_call.1']
    #allocation10 [shape = 'u8[262144]{0}', space=vmem, size = 0x40000, scoped, tag = 'input window, operand 6, single buffered']
    #allocation11 [shape = 'u8[262144]{0}', space=vmem, size = 0x40000, scoped, tag = 'input window, operand 8, single buffered']
    #allocation12 [shape = 's32[1]{0}', space=sflag, size = 0x4, scoped, tag = 'scoped memory for tpu_custom_call.1']
    #allocation13 [shape = 'u8[262144]{0}', space=vmem, size = 0x40000, scoped, tag = 'input window, operand 10, single buffered']
    #allocation14 [shape = 'u8[262144]{0}', space=vmem, size = 0x40000, scoped, tag = 'input window, operand 12, single buffered']
    #allocation15 [shape = 's32[1]{0}', space=sflag, size = 0x4, scoped, tag = 'scoped memory for tpu_custom_call.1']
    #allocation16 [shape = 'u8[131072]{0}', space=vmem, size = 0x20000, scoped, tag = 'input window, operand 14, single buffered']
    #allocation17 [shape = 'u8[40960]{0}', space=vmem, size = 0xa000, scoped, tag = 'output window, operand 0, single buffered']
    %21 = vsyncpa [#allocation3], 0
    %22 = vsyncpa [#allocation6], 0
    %23 = vsyncpa [#allocation9], 0
    %24 = vsyncpa [#allocation12], 0
    %25 = vsyncpa [#allocation15], 0
    %26 = vsyncpa [#allocation4], 0
    // Predicated region
    $region2: #{tpu_custom_call.1} parent=1 // pred_check
      _
    $region3: #{tpu_custom_call.1} parent=1 // pred_check_branch
      %28 = sbr.rel (0) target = $region5
    $region4: #{tpu_custom_call.1} parent=1 // pred_region
      %s30 = ssub.s32 512, 512
      %31 = vsyncadd [#allocation3], %s30
      %s32 = sshll.u32 [#allocation2], 4
      %s33 = int_to_ptr.vmem [resolvable:$true] %s32
      %38 = dma.hbm_to_vmem [thread:$0]  %s0, 512, %s33, [#allocation3], 256, 256, 16
    $region5: #{tpu_custom_call.1} parent=1 // pred_fallthru
      _
    // Predicated region
    $region6: #{tpu_custom_call.1} parent=1 // pred_check
      _
    $region7: #{tpu_custom_call.1} parent=1 // pred_check_branch
      %40 = sbr.rel (0) target = $region9
    $region8: #{tpu_custom_call.1} parent=1 // pred_region
      %s42 = ssub.s32 512, 512
      %43 = vsyncadd [#allocation6], %s42
      %s44 = sshll.u32 [#allocation5], 4
      %s45 = int_to_ptr.vmem [resolvable:$true] %s44
      %50 = dma.hbm_to_vmem [thread:$0]  %s1, 512, %s45, [#allocation6], 256, 256, 16
    $region9: #{tpu_custom_call.1} parent=1 // pred_fallthru
      _
    // Predicated region
    $region10: #{tpu_custom_call.1} parent=1 // pred_check
      _
    $region11: #{tpu_custom_call.1} parent=1 // pred_check_branch
      %52 = sbr.rel (0) target = $region13
    $region12: #{tpu_custom_call.1} parent=1 // pred_region
      %s54 = ssub.s32 8192, 8192
      %55 = vsyncadd [#allocation6], %s54
      %s56 = sshll.u32 [#allocation7], 4
      %s57 = int_to_ptr.vmem [resolvable:$true] %s56
      %62 = dma.hbm_to_vmem [thread:$0]  %s2, 8192, %s57, [#allocation6], 256, 256, 16
    $region13: #{tpu_custom_call.1} parent=1 // pred_fallthru
      _
    // Predicated region
    $region14: #{tpu_custom_call.1} parent=1 // pred_check
      _
    $region15: #{tpu_custom_call.1} parent=1 // pred_check_branch
      %64 = sbr.rel (0) target = $region17
    $region16: #{tpu_custom_call.1} parent=1 // pred_region
      _
    $region17: #{tpu_custom_call.1} parent=1 // pred_fallthru
      _
    // Predicated region
    $region18: #{tpu_custom_call.1} parent=1 // pred_check
      _
    $region19: #{tpu_custom_call.1} parent=1 // pred_check_branch
      %66 = sbr.rel (0) target = $region21
    $region20: #{tpu_custom_call.1} parent=1 // pred_region
      %s68 = ssub.s32 8192, 8192
      %69 = vsyncadd [#allocation9], %s68
      %s70 = sshll.u32 [#allocation8], 4
      %s71 = int_to_ptr.vmem [resolvable:$true] %s70
      %76 = dma.hbm_to_vmem [thread:$0]  %s4, 8192, %s71, [#allocation9], 256, 256, 16
    $region21: #{tpu_custom_call.1} parent=1 // pred_fallthru
      _
    // Predicated region
    $region22: #{tpu_custom_call.1} parent=1 // pred_check
      _
    $region23: #{tpu_custom_call.1} parent=1 // pred_check_branch
      %78 = sbr.rel (0) target = $region25
    $region24: #{tpu_custom_call.1} parent=1 // pred_region
      _
    $region25: #{tpu_custom_call.1} parent=1 // pred_fallthru
      _
    // Predicated region
    $region26: #{tpu_custom_call.1} parent=1 // pred_check
      _
    $region27: #{tpu_custom_call.1} parent=1 // pred_check_branch
      %80 = sbr.rel (0) target = $region29
    $region28: #{tpu_custom_call.1} parent=1 // pred_region
      %s82 = ssub.s32 8192, 8192
      %83 = vsyncadd [#allocation9], %s82
      %s84 = sshll.u32 [#allocation10], 4
      %s85 = int_to_ptr.vmem [resolvable:$true] %s84
      %90 = dma.hbm_to_vmem [thread:$0]  %s6, 8192, %s85, [#allocation9], 256, 256, 16
    $region29: #{tpu_custom_call.1} parent=1 // pred_fallthru
      _
    // Predicated region
    $region30: #{tpu_custom_call.1} parent=1 // pred_check
      _
    $region31: #{tpu_custom_call.1} parent=1 // pred_check_branch
      %92 = sbr.rel (0) target = $region33
    $region32: #{tpu_custom_call.1} parent=1 // pred_region
      _
    $region33: #{tpu_custom_call.1} parent=1 // pred_fallthru
      _
    // Predicated region
    $region34: #{tpu_custom_call.1} parent=1 // pred_check
      _
    $region35: #{tpu_custom_call.1} parent=1 // pred_check_branch
      %94 = sbr.rel (0) target = $region37
    $region36: #{tpu_custom_call.1} parent=1 // pred_region
      %s96 = ssub.s32 8192, 8192
      %97 = vsyncadd [#allocation12], %s96
      %s98 = sshll.u32 [#allocation11], 4
      %s99 = int_to_ptr.vmem [resolvable:$true] %s98
      %104 = dma.hbm_to_vmem [thread:$0]  %s8, 8192, %s99, [#allocation12], 256, 256, 16
    $region37: #{tpu_custom_call.1} parent=1 // pred_fallthru
      _
    // Predicated region
    $region38: #{tpu_custom_call.1} parent=1 // pred_check
      _
    $region39: #{tpu_custom_call.1} parent=1 // pred_check_branch
      %106 = sbr.rel (0) target = $region41
    $region40: #{tpu_custom_call.1} parent=1 // pred_region
      _
    $region41: #{tpu_custom_call.1} parent=1 // pred_fallthru
      _
    // Predicated region
    $region42: #{tpu_custom_call.1} parent=1 // pred_check
      _
    $region43: #{tpu_custom_call.1} parent=1 // pred_check_branch
      %108 = sbr.rel (0) target = $region45
    $region44: #{tpu_custom_call.1} parent=1 // pred_region
      %s110 = ssub.s32 8192, 8192
      %111 = vsyncadd [#allocation12], %s110
      %s112 = sshll.u32 [#allocation13], 4
      %s113 = int_to_ptr.vmem [resolvable:$true] %s112
      %118 = dma.hbm_to_vmem [thread:$0]  %s10, 8192, %s113, [#allocation12], 256, 256, 16
    $region45: #{tpu_custom_call.1} parent=1 // pred_fallthru
      _
    // Predicated region
    $region46: #{tpu_custom_call.1} parent=1 // pred_check
      _
    $region47: #{tpu_custom_call.1} parent=1 // pred_check_branch
      %120 = sbr.rel (0) target = $region49
    $region48: #{tpu_custom_call.1} parent=1 // pred_region
      _
    $region49: #{tpu_custom_call.1} parent=1 // pred_fallthru
      _
    // Predicated region
    $region50: #{tpu_custom_call.1} parent=1 // pred_check
      _
    $region51: #{tpu_custom_call.1} parent=1 // pred_check_branch
      %122 = sbr.rel (0) target = $region53
    $region52: #{tpu_custom_call.1} parent=1 // pred_region
      %s124 = ssub.s32 8192, 8192
      %125 = vsyncadd [#allocation15], %s124
      %s126 = sshll.u32 [#allocation14], 4
      %s127 = int_to_ptr.vmem [resolvable:$true] %s126
      %132 = dma.hbm_to_vmem [thread:$0]  %s12, 8192, %s127, [#allocation15], 256, 256, 16
    $region53: #{tpu_custom_call.1} parent=1 // pred_fallthru
      _
    // Predicated region
    $region54: #{tpu_custom_call.1} parent=1 // pred_check
      _
    $region55: #{tpu_custom_call.1} parent=1 // pred_check_branch
      %134 = sbr.rel (0) target = $region57
    $region56: #{tpu_custom_call.1} parent=1 // pred_region
      _
    $region57: #{tpu_custom_call.1} parent=1 // pred_fallthru
      _
    // Predicated region
    $region58: #{tpu_custom_call.1} parent=1 // pred_check
      _
    $region59: #{tpu_custom_call.1} parent=1 // pred_check_branch
      %136 = sbr.rel (0) target = $region61
    $region60: #{tpu_custom_call.1} parent=1 // pred_region
      %s138 = ssub.s32 4096, 4096
      %139 = vsyncadd [#allocation15], %s138
      %s140 = sshll.u32 [#allocation16], 4
      %s141 = int_to_ptr.vmem [resolvable:$true] %s140
      %146 = dma.hbm_to_vmem [thread:$0]  %s14, 4096, %s141, [#allocation15], 128, 128, 8
    $region61: #{tpu_custom_call.1} parent=1 // pred_fallthru
      _
    // Predicated region
    $region62: #{tpu_custom_call.1} parent=1 // pred_check
      _
    $region63: #{tpu_custom_call.1} parent=1 // pred_check_branch
      %148 = sbr.rel (0) target = $region65
    $region64: #{tpu_custom_call.1} parent=1 // pred_region
      _
    $region65: #{tpu_custom_call.1} parent=1 // pred_fallthru
      _
    // Predicated region
    $region66: #{tpu_custom_call.1} parent=1 // pred_check
      _
    $region67: #{tpu_custom_call.1} parent=1 // pred_check_branch
      %150 = sbr.rel (0) target = $region69
    $region68: #{tpu_custom_call.1} parent=1 // pred_region
      %151 = dma.done [#allocation3], 512
    $region69: #{tpu_custom_call.1} parent=1 // pred_fallthru
      _
    // Predicated region
    $region70: #{tpu_custom_call.1} parent=1 // pred_check
      _
    $region71: #{tpu_custom_call.1} parent=1 // pred_check_branch
      %153 = sbr.rel (0) target = $region73
    $region72: #{tpu_custom_call.1} parent=1 // pred_region
      %154 = dma.done [#allocation6], 512
    $region73: #{tpu_custom_call.1} parent=1 // pred_fallthru
      _
    // Predicated region
    $region74: #{tpu_custom_call.1} parent=1 // pred_check
      _
    $region75: #{tpu_custom_call.1} parent=1 // pred_check_branch
      %156 = sbr.rel (0) target = $region77
    $region76: #{tpu_custom_call.1} parent=1 // pred_region
      %157 = dma.done [#allocation6], 8192
    $region77: #{tpu_custom_call.1} parent=1 // pred_fallthru
      _
    // Predicated region
    $region78: #{tpu_custom_call.1} parent=1 // pred_check
      _
    $region79: #{tpu_custom_call.1} parent=1 // pred_check_branch
      %159 = sbr.rel (0) target = $region81
    $region80: #{tpu_custom_call.1} parent=1 // pred_region
      %160 = dma.done [#allocation9], 8192
    $region81: #{tpu_custom_call.1} parent=1 // pred_fallthru
      _
    // Predicated region
    $region82: #{tpu_custom_call.1} parent=1 // pred_check
      _
    $region83: #{tpu_custom_call.1} parent=1 // pred_check_branch
      %162 = sbr.rel (0) target = $region85
    $region84: #{tpu_custom_call.1} parent=1 // pred_region
      %163 = dma.done [#allocation9], 8192
    $region85: #{tpu_custom_call.1} parent=1 // pred_fallthru
      _
    // Predicated region
    $region86: #{tpu_custom_call.1} parent=1 // pred_check
      _
    $region87: #{tpu_custom_call.1} parent=1 // pred_check_branch
      %165 = sbr.rel (0) target = $region89
    $region88: #{tpu_custom_call.1} parent=1 // pred_region
      %166 = dma.done [#allocation12], 8192
    $region89: #{tpu_custom_call.1} parent=1 // pred_fallthru
      _
    // Predicated region
    $region90: #{tpu_custom_call.1} parent=1 // pred_check
      _
    $region91: #{tpu_custom_call.1} parent=1 // pred_check_branch
      %168 = sbr.rel (0) target = $region93
    $region92: #{tpu_custom_call.1} parent=1 // pred_region
      %169 = dma.done [#allocation12], 8192
    $region93: #{tpu_custom_call.1} parent=1 // pred_fallthru
      _
    // Predicated region
    $region94: #{tpu_custom_call.1} parent=1 // pred_check
      _
    $region95: #{tpu_custom_call.1} parent=1 // pred_check_branch
      %171 = sbr.rel (0) target = $region97
    $region96: #{tpu_custom_call.1} parent=1 // pred_region
      %172 = dma.done [#allocation15], 8192
    $region97: #{tpu_custom_call.1} parent=1 // pred_fallthru
      _
    // Predicated region
    $region98: #{tpu_custom_call.1} parent=1 // pred_check
      _
    $region99: #{tpu_custom_call.1} parent=1 // pred_check_branch
      %174 = sbr.rel (0) target = $region101
    $region100: #{tpu_custom_call.1} parent=1 // pred_region
      %175 = dma.done [#allocation15], 4096
    $region101: #{tpu_custom_call.1} parent=1 // pred_fallthru
      _
    %v176 = vld [vmem:[#allocation2] sm:$0xff]
    %v177 = vld [vmem:[#allocation2 + $0x8] sm:$0xff]
    %v178 = vld [vmem:[#allocation2 + $0x10] sm:$0xff]
    %v179 = vld [vmem:[#allocation2 + $0x18] sm:$0xff]
    %v180 = vld [vmem:[#allocation5] sm:$0xff]
    %v181 = vld [vmem:[#allocation5 + $0x8] sm:$0xff]
    %v182 = vld [vmem:[#allocation5 + $0x10] sm:$0xff]
    %v183 = vld [vmem:[#allocation5 + $0x18] sm:$0xff]
    %v184 = vld [vmem:[#allocation7] sm:$0xff]
    %v185 = vld [vmem:[#allocation7 + $0x8] sm:$0xff]
    %v186 = vld [vmem:[#allocation7 + $0x10] sm:$0xff]
    %v187 = vld [vmem:[#allocation7 + $0x18] sm:$0xff]
    %v188 = vld [vmem:[#allocation7 + $0x20] sm:$0xff]
    %v189 = vld [vmem:[#allocation7 + $0x28] sm:$0xff]
    %v190 = vld [vmem:[#allocation7 + $0x30] sm:$0xff]
    %v191 = vld [vmem:[#allocation7 + $0x38] sm:$0xff]
    %v192 = vld [vmem:[#allocation7 + $0x40] sm:$0xff]
    %v193 = vld [vmem:[#allocation7 + $0x48] sm:$0xff]
    %v194 = vld [vmem:[#allocation7 + $0x50] sm:$0xff]
    %v195 = vld [vmem:[#allocation7 + $0x58] sm:$0xff]
    %v196 = vld [vmem:[#allocation7 + $0x60] sm:$0xff]
    %v197 = vld [vmem:[#allocation7 + $0x68] sm:$0xff]
    %v198 = vld [vmem:[#allocation7 + $0x70] sm:$0xff]
    %v199 = vld [vmem:[#allocation7 + $0x78] sm:$0xff]
    %v200 = vld [vmem:[#allocation7 + $0x80] sm:$0xff]
    %v201 = vld [vmem:[#allocation7 + $0x88] sm:$0xff]
    %v202 = vld [vmem:[#allocation7 + $0x90] sm:$0xff]
    %v203 = vld [vmem:[#allocation7 + $0x98] sm:$0xff]
    %v204 = vld [vmem:[#allocation7 + $0xa0] sm:$0xff]
    %v205 = vld [vmem:[#allocation7 + $0xa8] sm:$0xff]
    %v206 = vld [vmem:[#allocation7 + $0xb0] sm:$0xff]
    %v207 = vld [vmem:[#allocation7 + $0xb8] sm:$0xff]
    %v208 = vld [vmem:[#allocation7 + $0xc0] sm:$0xff]
    %v209 = vld [vmem:[#allocation7 + $0xc8] sm:$0xff]
    %v210 = vld [vmem:[#allocation7 + $0xd0] sm:$0xff]
    %v211 = vld [vmem:[#allocation7 + $0xd8] sm:$0xff]
    %v212 = vld [vmem:[#allocation7 + $0xe0] sm:$0xff]
    %v213 = vld [vmem:[#allocation7 + $0xe8] sm:$0xff]
    %v214 = vld [vmem:[#allocation7 + $0xf0] sm:$0xff]
    %v215 = vld [vmem:[#allocation7 + $0xf8] sm:$0xff]
    %v216 = vld [vmem:[#allocation7 + $0x100] sm:$0xff]
    %v217 = vld [vmem:[#allocation7 + $0x108] sm:$0xff]
    %v218 = vld [vmem:[#allocation7 + $0x110] sm:$0xff]
    %v219 = vld [vmem:[#allocation7 + $0x118] sm:$0xff]
    %v220 = vld [vmem:[#allocation7 + $0x120] sm:$0xff]
    %v221 = vld [vmem:[#allocation7 + $0x128] sm:$0xff]
    %v222 = vld [vmem:[#allocation7 + $0x130] sm:$0xff]
    %v223 = vld [vmem:[#allocation7 + $0x138] sm:$0xff]
    %v224 = vld [vmem:[#allocation7 + $0x140] sm:$0xff]
    %v225 = vld [vmem:[#allocation7 + $0x148] sm:$0xff]
    %v226 = vld [vmem:[#allocation7 + $0x150] sm:$0xff]
    %v227 = vld [vmem:[#allocation7 + $0x158] sm:$0xff]
    %v228 = vld [vmem:[#allocation7 + $0x160] sm:$0xff]
    %v229 = vld [vmem:[#allocation7 + $0x168] sm:$0xff]
    %v230 = vld [vmem:[#allocation7 + $0x170] sm:$0xff]
    %v231 = vld [vmem:[#allocation7 + $0x178] sm:$0xff]
    %v232 = vld [vmem:[#allocation7 + $0x180] sm:$0xff]
    %v233 = vld [vmem:[#allocation7 + $0x188] sm:$0xff]
    %v234 = vld [vmem:[#allocation7 + $0x190] sm:$0xff]
    %v235 = vld [vmem:[#allocation7 + $0x198] sm:$0xff]
    %v236 = vld [vmem:[#allocation7 + $0x1a0] sm:$0xff]
    %v237 = vld [vmem:[#allocation7 + $0x1a8] sm:$0xff]
    %v238 = vld [vmem:[#allocation7 + $0x1b0] sm:$0xff]
    %v239 = vld [vmem:[#allocation7 + $0x1b8] sm:$0xff]
    %v240 = vld [vmem:[#allocation7 + $0x1c0] sm:$0xff]
    %v241 = vld [vmem:[#allocation7 + $0x1c8] sm:$0xff]
    %v242 = vld [vmem:[#allocation7 + $0x1d0] sm:$0xff]
    %v243 = vld [vmem:[#allocation7 + $0x1d8] sm:$0xff]
    %v244 = vld [vmem:[#allocation7 + $0x1e0] sm:$0xff]
    %v245 = vld [vmem:[#allocation7 + $0x1e8] sm:$0xff]
    %v246 = vld [vmem:[#allocation7 + $0x1f0] sm:$0xff]
    %v247 = vld [vmem:[#allocation7 + $0x1f8] sm:$0xff]
    %v248 = vld [vmem:[%s3] sm:$0x3]
    %v250 = vlaneseq
    %v251 = vshrl.u32 %v250, 7
    %v252 = vsub.s32 0, %v251
    %v253 = vrot.slane %v248, %v252
    %v254 = vlaneseq
    %v255 = vshrl.u32 %v254, 7
    %v256 = vsub.s32 1, %v255
    %v257 = vrot.slane %v248, %v256
    %260 = vmatprep.subr.mxu0 %v185
    %261 = vmatpush1.msra.mxu0 %v184
    %262 = vmatprep.subr.mxu0 %v187
    %263 = vmatpush1.msra.mxu0 %v186
    %264 = vmatprep.subr.mxu0 %v189
    %265 = vmatpush1.msra.mxu0 %v188
    %266 = vmatprep.subr.mxu0 %v191
    %267 = vmatpush1.msra.mxu0 %v190
    %268 = vmatprep.subr.mxu0 %v193
    %269 = vmatpush1.msra.mxu0 %v192
    %270 = vmatprep.subr.mxu0 %v195
    %271 = vmatpush1.msra.mxu0 %v194
    %272 = vmatprep.subr.mxu0 %v197
    %273 = vmatpush1.msra.mxu0 %v196
    %274 = vmatprep.subr.mxu0 %v199
    %275 = vmatpush1.msra.mxu0 %v198
    %276 = vmatprep.subr.mxu0 %v201
    %277 = vmatpush1.msra.mxu0 %v200
    %278 = vmatprep.subr.mxu0 %v203
    %279 = vmatpush1.msra.mxu0 %v202
    %280 = vmatprep.subr.mxu0 %v205
    %281 = vmatpush1.msra.mxu0 %v204
    %282 = vmatprep.subr.mxu0 %v207
    %283 = vmatpush1.msra.mxu0 %v206
    %284 = vmatprep.subr.mxu0 %v209
    %285 = vmatpush1.msra.mxu0 %v208
    %286 = vmatprep.subr.mxu0 %v211
    %287 = vmatpush1.msra.mxu0 %v210
    %288 = vmatprep.subr.mxu0 %v213
    %289 = vmatpush1.msra.mxu0 %v212
    %290 = vmatprep.subr.mxu0 %v215
    %291 = vmatpush1.msra.mxu0 %v214
    %292 = vmatprep.subr.mxu0 %v217
    %293 = vmatpush1.msra.mxu0 %v216
    %294 = vmatprep.subr.mxu0 %v219
    %295 = vmatpush1.msra.mxu0 %v218
    %296 = vmatprep.subr.mxu0 %v221
    %297 = vmatpush1.msra.mxu0 %v220
    %298 = vmatprep.subr.mxu0 %v223
    %299 = vmatpush1.msra.mxu0 %v222
    %300 = vmatprep.subr.mxu0 %v225
    %301 = vmatpush1.msra.mxu0 %v224
    %302 = vmatprep.subr.mxu0 %v227
    %303 = vmatpush1.msra.mxu0 %v226
    %304 = vmatprep.subr.mxu0 %v229
    %305 = vmatpush1.msra.mxu0 %v228
    %306 = vmatprep.subr.mxu0 %v231
    %307 = vmatpush1.msra.mxu0 %v230
    %308 = vmatprep.subr.mxu0 %v233
    %309 = vmatpush1.msra.mxu0 %v232
    %310 = vmatprep.subr.mxu0 %v235
    %311 = vmatpush1.msra.mxu0 %v234
    %312 = vmatprep.subr.mxu0 %v237
    %313 = vmatpush1.msra.mxu0 %v236
    %314 = vmatprep.subr.mxu0 %v239
    %315 = vmatpush1.msra.mxu0 %v238
    %316 = vmatprep.subr.mxu0 %v241
    %317 = vmatpush1.msra.mxu0 %v240
    %318 = vmatprep.subr.mxu0 %v243
    %319 = vmatpush1.msra.mxu0 %v242
    %320 = vmatprep.subr.mxu0 %v245
    %321 = vmatpush1.msra.mxu0 %v244
    %322 = vmatprep.subr.mxu0 %v247
    %323 = vmatpush1.msra.mxu0 %v246
    %324 = vmatprep.mubr.f32.mxu0 %v177
    %325 = vmatmul.mubr.f32.gmra.mrb[0].mxu0 %v176
    %v326 = vpop.f32.mrb[0].mxu0
    %v327 = vadd.f32 %v253, %v326
    %v328 = vpop.f32.mrb[0].mxu0
    %v329 = vadd.f32 %v257, %v328
    %330 = vmatprep.mubr.f32.mxu0 %v179
    %331 = vmatmul.mubr.f32.gmra.mrb[0].mxu0 %v178
    %v332 = vpop.f32.mrb[0].mxu0
    %v333 = vadd.f32 %v253, %v332
    %v334 = vpop.f32.mrb[0].mxu0
    %v335 = vadd.f32 %v257, %v334
    %336 = vdwg.mxu0
    %v337 = vmax.f32 %v327, 0.0
    %v338 = vmax.f32 %v329, 0.0
    %v339 = vmax.f32 %v333, 0.0
    %v340 = vmax.f32 %v335, 0.0
    %v341 = vld [vmem:[#allocation8] sm:$0xff]
    %v342 = vld [vmem:[#allocation8 + $0x8] sm:$0xff]
    %v343 = vld [vmem:[#allocation8 + $0x10] sm:$0xff]
    %v344 = vld [vmem:[#allocation8 + $0x18] sm:$0xff]
    %v345 = vld [vmem:[#allocation8 + $0x20] sm:$0xff]
    %v346 = vld [vmem:[#allocation8 + $0x28] sm:$0xff]
    %v347 = vld [vmem:[#allocation8 + $0x30] sm:$0xff]
    %v348 = vld [vmem:[#allocation8 + $0x38] sm:$0xff]
    %v349 = vld [vmem:[#allocation8 + $0x40] sm:$0xff]
    %v350 = vld [vmem:[#allocation8 + $0x48] sm:$0xff]
    %v351 = vld [vmem:[#allocation8 + $0x50] sm:$0xff]
    %v352 = vld [vmem:[#allocation8 + $0x58] sm:$0xff]
    %v353 = vld [vmem:[#allocation8 + $0x60] sm:$0xff]
    %v354 = vld [vmem:[#allocation8 + $0x68] sm:$0xff]
    %v355 = vld [vmem:[#allocation8 + $0x70] sm:$0xff]
    %v356 = vld [vmem:[#allocation8 + $0x78] sm:$0xff]
    %v357 = vld [vmem:[#allocation8 + $0x80] sm:$0xff]
    %v358 = vld [vmem:[#allocation8 + $0x88] sm:$0xff]
    %v359 = vld [vmem:[#allocation8 + $0x90] sm:$0xff]
    %v360 = vld [vmem:[#allocation8 + $0x98] sm:$0xff]
    %v361 = vld [vmem:[#allocation8 + $0xa0] sm:$0xff]
    %v362 = vld [vmem:[#allocation8 + $0xa8] sm:$0xff]
    %v363 = vld [vmem:[#allocation8 + $0xb0] sm:$0xff]
    %v364 = vld [vmem:[#allocation8 + $0xb8] sm:$0xff]
    %v365 = vld [vmem:[#allocation8 + $0xc0] sm:$0xff]
    %v366 = vld [vmem:[#allocation8 + $0xc8] sm:$0xff]
    %v367 = vld [vmem:[#allocation8 + $0xd0] sm:$0xff]
    %v368 = vld [vmem:[#allocation8 + $0xd8] sm:$0xff]
    %v369 = vld [vmem:[#allocation8 + $0xe0] sm:$0xff]
    %v370 = vld [vmem:[#allocation8 + $0xe8] sm:$0xff]
    %v371 = vld [vmem:[#allocation8 + $0xf0] sm:$0xff]
    %v372 = vld [vmem:[#allocation8 + $0xf8] sm:$0xff]
    %v373 = vld [vmem:[#allocation8 + $0x100] sm:$0xff]
    %v374 = vld [vmem:[#allocation8 + $0x108] sm:$0xff]
    %v375 = vld [vmem:[#allocation8 + $0x110] sm:$0xff]
    %v376 = vld [vmem:[#allocation8 + $0x118] sm:$0xff]
    %v377 = vld [vmem:[#allocation8 + $0x120] sm:$0xff]
    %v378 = vld [vmem:[#allocation8 + $0x128] sm:$0xff]
    %v379 = vld [vmem:[#allocation8 + $0x130] sm:$0xff]
    %v380 = vld [vmem:[#allocation8 + $0x138] sm:$0xff]
    %v381 = vld [vmem:[#allocation8 + $0x140] sm:$0xff]
    %v382 = vld [vmem:[#allocation8 + $0x148] sm:$0xff]
    %v383 = vld [vmem:[#allocation8 + $0x150] sm:$0xff]
    %v384 = vld [vmem:[#allocation8 + $0x158] sm:$0xff]
    %v385 = vld [vmem:[#allocation8 + $0x160] sm:$0xff]
    %v386 = vld [vmem:[#allocation8 + $0x168] sm:$0xff]
    %v387 = vld [vmem:[#allocation8 + $0x170] sm:$0xff]
    %v388 = vld [vmem:[#allocation8 + $0x178] sm:$0xff]
    %v389 = vld [vmem:[#allocation8 + $0x180] sm:$0xff]
    %v390 = vld [vmem:[#allocation8 + $0x188] sm:$0xff]
    %v391 = vld [vmem:[#allocation8 + $0x190] sm:$0xff]
    %v392 = vld [vmem:[#allocation8 + $0x198] sm:$0xff]
    %v393 = vld [vmem:[#allocation8 + $0x1a0] sm:$0xff]
    %v394 = vld [vmem:[#allocation8 + $0x1a8] sm:$0xff]
    %v395 = vld [vmem:[#allocation8 + $0x1b0] sm:$0xff]
    %v396 = vld [vmem:[#allocation8 + $0x1b8] sm:$0xff]
    %v397 = vld [vmem:[#allocation8 + $0x1c0] sm:$0xff]
    %v398 = vld [vmem:[#allocation8 + $0x1c8] sm:$0xff]
    %v399 = vld [vmem:[#allocation8 + $0x1d0] sm:$0xff]
    %v400 = vld [vmem:[#allocation8 + $0x1d8] sm:$0xff]
    %v401 = vld [vmem:[#allocation8 + $0x1e0] sm:$0xff]
    %v402 = vld [vmem:[#allocation8 + $0x1e8] sm:$0xff]
    %v403 = vld [vmem:[#allocation8 + $0x1f0] sm:$0xff]
    %v404 = vld [vmem:[#allocation8 + $0x1f8] sm:$0xff]
    %v405 = vld [vmem:[%s5] sm:$0x3]
    %v407 = vlaneseq
    %v408 = vshrl.u32 %v407, 7
    %v409 = vsub.s32 0, %v408
    %v410 = vrot.slane %v405, %v409
    %v411 = vlaneseq
    %v412 = vshrl.u32 %v411, 7
    %v413 = vsub.s32 1, %v412
    %v414 = vrot.slane %v405, %v413
    %417 = vmatprep.subr.mxu0 %v342
    %418 = vmatpush1.msra.mxu0 %v341
    %419 = vmatprep.subr.mxu0 %v344
    %420 = vmatpush1.msra.mxu0 %v343
    %421 = vmatprep.subr.mxu0 %v346
    %422 = vmatpush1.msra.mxu0 %v345
    %423 = vmatprep.subr.mxu0 %v348
    %424 = vmatpush1.msra.mxu0 %v347
    %425 = vmatprep.subr.mxu0 %v350
    %426 = vmatpush1.msra.mxu0 %v349
    %427 = vmatprep.subr.mxu0 %v352
    %428 = vmatpush1.msra.mxu0 %v351
    %429 = vmatprep.subr.mxu0 %v354
    %430 = vmatpush1.msra.mxu0 %v353
    %431 = vmatprep.subr.mxu0 %v356
    %432 = vmatpush1.msra.mxu0 %v355
    %433 = vmatprep.subr.mxu0 %v358
    %434 = vmatpush1.msra.mxu0 %v357
    %435 = vmatprep.subr.mxu0 %v360
    %436 = vmatpush1.msra.mxu0 %v359
    %437 = vmatprep.subr.mxu0 %v362
    %438 = vmatpush1.msra.mxu0 %v361
    %439 = vmatprep.subr.mxu0 %v364
    %440 = vmatpush1.msra.mxu0 %v363
    %441 = vmatprep.subr.mxu0 %v366
    %442 = vmatpush1.msra.mxu0 %v365
    %443 = vmatprep.subr.mxu0 %v368
    %444 = vmatpush1.msra.mxu0 %v367
    %445 = vmatprep.subr.mxu0 %v370
    %446 = vmatpush1.msra.mxu0 %v369
    %447 = vmatprep.subr.mxu0 %v372
    %448 = vmatpush1.msra.mxu0 %v371
    %449 = vmatprep.subr.mxu0 %v374
    %450 = vmatpush1.msra.mxu0 %v373
    %451 = vmatprep.subr.mxu0 %v376
    %452 = vmatpush1.msra.mxu0 %v375
    %453 = vmatprep.subr.mxu0 %v378
    %454 = vmatpush1.msra.mxu0 %v377
    %455 = vmatprep.subr.mxu0 %v380
    %456 = vmatpush1.msra.mxu0 %v379
    %457 = vmatprep.subr.mxu0 %v382
    %458 = vmatpush1.msra.mxu0 %v381
    %459 = vmatprep.subr.mxu0 %v384
    %460 = vmatpush1.msra.mxu0 %v383
    %461 = vmatprep.subr.mxu0 %v386
    %462 = vmatpush1.msra.mxu0 %v385
    %463 = vmatprep.subr.mxu0 %v388
    %464 = vmatpush1.msra.mxu0 %v387
    %465 = vmatprep.subr.mxu0 %v390
    %466 = vmatpush1.msra.mxu0 %v389
    %467 = vmatprep.subr.mxu0 %v392
    %468 = vmatpush1.msra.mxu0 %v391
    %469 = vmatprep.subr.mxu0 %v394
    %470 = vmatpush1.msra.mxu0 %v393
    %471 = vmatprep.subr.mxu0 %v396
    %472 = vmatpush1.msra.mxu0 %v395
    %473 = vmatprep.subr.mxu0 %v398
    %474 = vmatpush1.msra.mxu0 %v397
    %475 = vmatprep.subr.mxu0 %v400
    %476 = vmatpush1.msra.mxu0 %v399
    %477 = vmatprep.subr.mxu0 %v402
    %478 = vmatpush1.msra.mxu0 %v401
    %479 = vmatprep.subr.mxu0 %v404
    %480 = vmatpush1.msra.mxu0 %v403
    %481 = vmatprep.mubr.f32.mxu0 %v338
    %482 = vmatmul.mubr.f32.gmra.mrb[0].mxu0 %v337
    %v483 = vpop.f32.mrb[0].mxu0
    %v484 = vadd.f32 %v410, %v483
    %v485 = vpop.f32.mrb[0].mxu0
    %v486 = vadd.f32 %v414, %v485
    %487 = vmatprep.mubr.f32.mxu0 %v340
    %488 = vmatmul.mubr.f32.gmra.mrb[0].mxu0 %v339
    %v489 = vpop.f32.mrb[0].mxu0
    %v490 = vadd.f32 %v410, %v489
    %v491 = vpop.f32.mrb[0].mxu0
    %v492 = vadd.f32 %v414, %v491
    %493 = vdwg.mxu0
    %494 = vst [vmem:[#allocation17] sm:$0xff] %v484
    %495 = vst [vmem:[#allocation17 + $0x8] sm:$0xff] %v486
    %496 = vst [vmem:[#allocation17 + $0x28] sm:$0xff] %v490
    %497 = vst [vmem:[#allocation17 + $0x30] sm:$0xff] %v492
    %v498 = vld [vmem:[#allocation10] sm:$0xff]
    %v499 = vld [vmem:[#allocation10 + $0x8] sm:$0xff]
    %v500 = vld [vmem:[#allocation10 + $0x10] sm:$0xff]
    %v501 = vld [vmem:[#allocation10 + $0x18] sm:$0xff]
    %v502 = vld [vmem:[#allocation10 + $0x20] sm:$0xff]
    %v503 = vld [vmem:[#allocation10 + $0x28] sm:$0xff]
    %v504 = vld [vmem:[#allocation10 + $0x30] sm:$0xff]
    %v505 = vld [vmem:[#allocation10 + $0x38] sm:$0xff]
    %v506 = vld [vmem:[#allocation10 + $0x40] sm:$0xff]
    %v507 = vld [vmem:[#allocation10 + $0x48] sm:$0xff]
    %v508 = vld [vmem:[#allocation10 + $0x50] sm:$0xff]
    %v509 = vld [vmem:[#allocation10 + $0x58] sm:$0xff]
    %v510 = vld [vmem:[#allocation10 + $0x60] sm:$0xff]
    %v511 = vld [vmem:[#allocation10 + $0x68] sm:$0xff]
    %v512 = vld [vmem:[#allocation10 + $0x70] sm:$0xff]
    %v513 = vld [vmem:[#allocation10 + $0x78] sm:$0xff]
    %v514 = vld [vmem:[#allocation10 + $0x80] sm:$0xff]
    %v515 = vld [vmem:[#allocation10 + $0x88] sm:$0xff]
    %v516 = vld [vmem:[#allocation10 + $0x90] sm:$0xff]
    %v517 = vld [vmem:[#allocation10 + $0x98] sm:$0xff]
    %v518 = vld [vmem:[#allocation10 + $0xa0] sm:$0xff]
    %v519 = vld [vmem:[#allocation10 + $0xa8] sm:$0xff]
    %v520 = vld [vmem:[#allocation10 + $0xb0] sm:$0xff]
    %v521 = vld [vmem:[#allocation10 + $0xb8] sm:$0xff]
    %v522 = vld [vmem:[#allocation10 + $0xc0] sm:$0xff]
    %v523 = vld [vmem:[#allocation10 + $0xc8] sm:$0xff]
    %v524 = vld [vmem:[#allocation10 + $0xd0] sm:$0xff]
    %v525 = vld [vmem:[#allocation10 + $0xd8] sm:$0xff]
    %v526 = vld [vmem:[#allocation10 + $0xe0] sm:$0xff]
    %v527 = vld [vmem:[#allocation10 + $0xe8] sm:$0xff]
    %v528 = vld [vmem:[#allocation10 + $0xf0] sm:$0xff]
    %v529 = vld [vmem:[#allocation10 + $0xf8] sm:$0xff]
    %v530 = vld [vmem:[#allocation10 + $0x100] sm:$0xff]
    %v531 = vld [vmem:[#allocation10 + $0x108] sm:$0xff]
    %v532 = vld [vmem:[#allocation10 + $0x110] sm:$0xff]
    %v533 = vld [vmem:[#allocation10 + $0x118] sm:$0xff]
    %v534 = vld [vmem:[#allocation10 + $0x120] sm:$0xff]
    %v535 = vld [vmem:[#allocation10 + $0x128] sm:$0xff]
    %v536 = vld [vmem:[#allocation10 + $0x130] sm:$0xff]
    %v537 = vld [vmem:[#allocation10 + $0x138] sm:$0xff]
    %v538 = vld [vmem:[#allocation10 + $0x140] sm:$0xff]
    %v539 = vld [vmem:[#allocation10 + $0x148] sm:$0xff]
    %v540 = vld [vmem:[#allocation10 + $0x150] sm:$0xff]
    %v541 = vld [vmem:[#allocation10 + $0x158] sm:$0xff]
    %v542 = vld [vmem:[#allocation10 + $0x160] sm:$0xff]
    %v543 = vld [vmem:[#allocation10 + $0x168] sm:$0xff]
    %v544 = vld [vmem:[#allocation10 + $0x170] sm:$0xff]
    %v545 = vld [vmem:[#allocation10 + $0x178] sm:$0xff]
    %v546 = vld [vmem:[#allocation10 + $0x180] sm:$0xff]
    %v547 = vld [vmem:[#allocation10 + $0x188] sm:$0xff]
    %v548 = vld [vmem:[#allocation10 + $0x190] sm:$0xff]
    %v549 = vld [vmem:[#allocation10 + $0x198] sm:$0xff]
    %v550 = vld [vmem:[#allocation10 + $0x1a0] sm:$0xff]
    %v551 = vld [vmem:[#allocation10 + $0x1a8] sm:$0xff]
    %v552 = vld [vmem:[#allocation10 + $0x1b0] sm:$0xff]
    %v553 = vld [vmem:[#allocation10 + $0x1b8] sm:$0xff]
    %v554 = vld [vmem:[#allocation10 + $0x1c0] sm:$0xff]
    %v555 = vld [vmem:[#allocation10 + $0x1c8] sm:$0xff]
    %v556 = vld [vmem:[#allocation10 + $0x1d0] sm:$0xff]
    %v557 = vld [vmem:[#allocation10 + $0x1d8] sm:$0xff]
    %v558 = vld [vmem:[#allocation10 + $0x1e0] sm:$0xff]
    %v559 = vld [vmem:[#allocation10 + $0x1e8] sm:$0xff]
    %v560 = vld [vmem:[#allocation10 + $0x1f0] sm:$0xff]
    %v561 = vld [vmem:[#allocation10 + $0x1f8] sm:$0xff]
    %v562 = vld [vmem:[%s7] sm:$0x3]
    %v564 = vlaneseq
    %v565 = vshrl.u32 %v564, 7
    %v566 = vsub.s32 0, %v565
    %v567 = vrot.slane %v562, %v566
    %v568 = vlaneseq
    %v569 = vshrl.u32 %v568, 7
    %v570 = vsub.s32 1, %v569
    %v571 = vrot.slane %v562, %v570
    %574 = vmatprep.subr.mxu0 %v499
    %575 = vmatpush1.msra.mxu0 %v498
    %576 = vmatprep.subr.mxu0 %v501
    %577 = vmatpush1.msra.mxu0 %v500
    %578 = vmatprep.subr.mxu0 %v503
    %579 = vmatpush1.msra.mxu0 %v502
    %580 = vmatprep.subr.mxu0 %v505
    %581 = vmatpush1.msra.mxu0 %v504
    %582 = vmatprep.subr.mxu0 %v507
    %583 = vmatpush1.msra.mxu0 %v506
    %584 = vmatprep.subr.mxu0 %v509
    %585 = vmatpush1.msra.mxu0 %v508
    %586 = vmatprep.subr.mxu0 %v511
    %587 = vmatpush1.msra.mxu0 %v510
    %588 = vmatprep.subr.mxu0 %v513
    %589 = vmatpush1.msra.mxu0 %v512
    %590 = vmatprep.subr.mxu0 %v515
    %591 = vmatpush1.msra.mxu0 %v514
    %592 = vmatprep.subr.mxu0 %v517
    %593 = vmatpush1.msra.mxu0 %v516
    %594 = vmatprep.subr.mxu0 %v519
    %595 = vmatpush1.msra.mxu0 %v518
    %596 = vmatprep.subr.mxu0 %v521
    %597 = vmatpush1.msra.mxu0 %v520
    %598 = vmatprep.subr.mxu0 %v523
    %599 = vmatpush1.msra.mxu0 %v522
    %600 = vmatprep.subr.mxu0 %v525
    %601 = vmatpush1.msra.mxu0 %v524
    %602 = vmatprep.subr.mxu0 %v527
    %603 = vmatpush1.msra.mxu0 %v526
    %604 = vmatprep.subr.mxu0 %v529
    %605 = vmatpush1.msra.mxu0 %v528
    %606 = vmatprep.subr.mxu0 %v531
    %607 = vmatpush1.msra.mxu0 %v530
    %608 = vmatprep.subr.mxu0 %v533
    %609 = vmatpush1.msra.mxu0 %v532
    %610 = vmatprep.subr.mxu0 %v535
    %611 = vmatpush1.msra.mxu0 %v534
    %612 = vmatprep.subr.mxu0 %v537
    %613 = vmatpush1.msra.mxu0 %v536
    %614 = vmatprep.subr.mxu0 %v539
    %615 = vmatpush1.msra.mxu0 %v538
    %616 = vmatprep.subr.mxu0 %v541
    %617 = vmatpush1.msra.mxu0 %v540
    %618 = vmatprep.subr.mxu0 %v543
    %619 = vmatpush1.msra.mxu0 %v542
    %620 = vmatprep.subr.mxu0 %v545
    %621 = vmatpush1.msra.mxu0 %v544
    %622 = vmatprep.subr.mxu0 %v547
    %623 = vmatpush1.msra.mxu0 %v546
    %624 = vmatprep.subr.mxu0 %v549
    %625 = vmatpush1.msra.mxu0 %v548
    %626 = vmatprep.subr.mxu0 %v551
    %627 = vmatpush1.msra.mxu0 %v550
    %628 = vmatprep.subr.mxu0 %v553
    %629 = vmatpush1.msra.mxu0 %v552
    %630 = vmatprep.subr.mxu0 %v555
    %631 = vmatpush1.msra.mxu0 %v554
    %632 = vmatprep.subr.mxu0 %v557
    %633 = vmatpush1.msra.mxu0 %v556
    %634 = vmatprep.subr.mxu0 %v559
    %635 = vmatpush1.msra.mxu0 %v558
    %636 = vmatprep.subr.mxu0 %v561
    %637 = vmatpush1.msra.mxu0 %v560
    %638 = vmatprep.mubr.f32.mxu0 %v181
    %639 = vmatmul.mubr.f32.gmra.mrb[0].mxu0 %v180
    %v640 = vpop.f32.mrb[0].mxu0
    %v641 = vadd.f32 %v567, %v640
    %v642 = vpop.f32.mrb[0].mxu0
    %v643 = vadd.f32 %v571, %v642
    %644 = vmatprep.mubr.f32.mxu0 %v183
    %645 = vmatmul.mubr.f32.gmra.mrb[0].mxu0 %v182
    %v646 = vpop.f32.mrb[0].mxu0
    %v647 = vadd.f32 %v567, %v646
    %v648 = vpop.f32.mrb[0].mxu0
    %v649 = vadd.f32 %v571, %v648
    %650 = vdwg.mxu0
    %v651 = vmax.f32 %v641, 0.0
    %v652 = vmax.f32 %v643, 0.0
    %v653 = vmax.f32 %v647, 0.0
    %v654 = vmax.f32 %v649, 0.0
    %v655 = vld [vmem:[#allocation11] sm:$0xff]
    %v656 = vld [vmem:[#allocation11 + $0x8] sm:$0xff]
    %v657 = vld [vmem:[#allocation11 + $0x10] sm:$0xff]
    %v658 = vld [vmem:[#allocation11 + $0x18] sm:$0xff]
    %v659 = vld [vmem:[#allocation11 + $0x20] sm:$0xff]
    %v660 = vld [vmem:[#allocation11 + $0x28] sm:$0xff]
    %v661 = vld [vmem:[#allocation11 + $0x30] sm:$0xff]
    %v662 = vld [vmem:[#allocation11 + $0x38] sm:$0xff]
    %v663 = vld [vmem:[#allocation11 + $0x40] sm:$0xff]
    %v664 = vld [vmem:[#allocation11 + $0x48] sm:$0xff]
    %v665 = vld [vmem:[#allocation11 + $0x50] sm:$0xff]
    %v666 = vld [vmem:[#allocation11 + $0x58] sm:$0xff]
    %v667 = vld [vmem:[#allocation11 + $0x60] sm:$0xff]
    %v668 = vld [vmem:[#allocation11 + $0x68] sm:$0xff]
    %v669 = vld [vmem:[#allocation11 + $0x70] sm:$0xff]
    %v670 = vld [vmem:[#allocation11 + $0x78] sm:$0xff]
    %v671 = vld [vmem:[#allocation11 + $0x80] sm:$0xff]
    %v672 = vld [vmem:[#allocation11 + $0x88] sm:$0xff]
    %v673 = vld [vmem:[#allocation11 + $0x90] sm:$0xff]
    %v674 = vld [vmem:[#allocation11 + $0x98] sm:$0xff]
    %v675 = vld [vmem:[#allocation11 + $0xa0] sm:$0xff]
    %v676 = vld [vmem:[#allocation11 + $0xa8] sm:$0xff]
    %v677 = vld [vmem:[#allocation11 + $0xb0] sm:$0xff]
    %v678 = vld [vmem:[#allocation11 + $0xb8] sm:$0xff]
    %v679 = vld [vmem:[#allocation11 + $0xc0] sm:$0xff]
    %v680 = vld [vmem:[#allocation11 + $0xc8] sm:$0xff]
    %v681 = vld [vmem:[#allocation11 + $0xd0] sm:$0xff]
    %v682 = vld [vmem:[#allocation11 + $0xd8] sm:$0xff]
    %v683 = vld [vmem:[#allocation11 + $0xe0] sm:$0xff]
    %v684 = vld [vmem:[#allocation11 + $0xe8] sm:$0xff]
    %v685 = vld [vmem:[#allocation11 + $0xf0] sm:$0xff]
    %v686 = vld [vmem:[#allocation11 + $0xf8] sm:$0xff]
    %v687 = vld [vmem:[#allocation11 + $0x100] sm:$0xff]
    %v688 = vld [vmem:[#allocation11 + $0x108] sm:$0xff]
    %v689 = vld [vmem:[#allocation11 + $0x110] sm:$0xff]
    %v690 = vld [vmem:[#allocation11 + $0x118] sm:$0xff]
    %v691 = vld [vmem:[#allocation11 + $0x120] sm:$0xff]
    %v692 = vld [vmem:[#allocation11 + $0x128] sm:$0xff]
    %v693 = vld [vmem:[#allocation11 + $0x130] sm:$0xff]
    %v694 = vld [vmem:[#allocation11 + $0x138] sm:$0xff]
    %v695 = vld [vmem:[#allocation11 + $0x140] sm:$0xff]
    %v696 = vld [vmem:[#allocation11 + $0x148] sm:$0xff]
    %v697 = vld [vmem:[#allocation11 + $0x150] sm:$0xff]
    %v698 = vld [vmem:[#allocation11 + $0x158] sm:$0xff]
    %v699 = vld [vmem:[#allocation11 + $0x160] sm:$0xff]
    %v700 = vld [vmem:[#allocation11 + $0x168] sm:$0xff]
    %v701 = vld [vmem:[#allocation11 + $0x170] sm:$0xff]
    %v702 = vld [vmem:[#allocation11 + $0x178] sm:$0xff]
    %v703 = vld [vmem:[#allocation11 + $0x180] sm:$0xff]
    %v704 = vld [vmem:[#allocation11 + $0x188] sm:$0xff]
    %v705 = vld [vmem:[#allocation11 + $0x190] sm:$0xff]
    %v706 = vld [vmem:[#allocation11 + $0x198] sm:$0xff]
    %v707 = vld [vmem:[#allocation11 + $0x1a0] sm:$0xff]
    %v708 = vld [vmem:[#allocation11 + $0x1a8] sm:$0xff]
    %v709 = vld [vmem:[#allocation11 + $0x1b0] sm:$0xff]
    %v710 = vld [vmem:[#allocation11 + $0x1b8] sm:$0xff]
    %v711 = vld [vmem:[#allocation11 + $0x1c0] sm:$0xff]
    %v712 = vld [vmem:[#allocation11 + $0x1c8] sm:$0xff]
    %v713 = vld [vmem:[#allocation11 + $0x1d0] sm:$0xff]
    %v714 = vld [vmem:[#allocation11 + $0x1d8] sm:$0xff]
    %v715 = vld [vmem:[#allocation11 + $0x1e0] sm:$0xff]
    %v716 = vld [vmem:[#allocation11 + $0x1e8] sm:$0xff]
    %v717 = vld [vmem:[#allocation11 + $0x1f0] sm:$0xff]
    %v718 = vld [vmem:[#allocation11 + $0x1f8] sm:$0xff]
    %v719 = vld [vmem:[%s9] sm:$0x3]
    %v721 = vlaneseq
    %v722 = vshrl.u32 %v721, 7
    %v723 = vsub.s32 0, %v722
    %v724 = vrot.slane %v719, %v723
    %v725 = vlaneseq
    %v726 = vshrl.u32 %v725, 7
    %v727 = vsub.s32 1, %v726
    %v728 = vrot.slane %v719, %v727
    %731 = vmatprep.subr.mxu0 %v656
    %732 = vmatpush1.msra.mxu0 %v655
    %733 = vmatprep.subr.mxu0 %v658
    %734 = vmatpush1.msra.mxu0 %v657
    %735 = vmatprep.subr.mxu0 %v660
    %736 = vmatpush1.msra.mxu0 %v659
    %737 = vmatprep.subr.mxu0 %v662
    %738 = vmatpush1.msra.mxu0 %v661
    %739 = vmatprep.subr.mxu0 %v664
    %740 = vmatpush1.msra.mxu0 %v663
    %741 = vmatprep.subr.mxu0 %v666
    %742 = vmatpush1.msra.mxu0 %v665
    %743 = vmatprep.subr.mxu0 %v668
    %744 = vmatpush1.msra.mxu0 %v667
    %745 = vmatprep.subr.mxu0 %v670
    %746 = vmatpush1.msra.mxu0 %v669
    %747 = vmatprep.subr.mxu0 %v672
    %748 = vmatpush1.msra.mxu0 %v671
    %749 = vmatprep.subr.mxu0 %v674
    %750 = vmatpush1.msra.mxu0 %v673
    %751 = vmatprep.subr.mxu0 %v676
    %752 = vmatpush1.msra.mxu0 %v675
    %753 = vmatprep.subr.mxu0 %v678
    %754 = vmatpush1.msra.mxu0 %v677
    %755 = vmatprep.subr.mxu0 %v680
    %756 = vmatpush1.msra.mxu0 %v679
    %757 = vmatprep.subr.mxu0 %v682
    %758 = vmatpush1.msra.mxu0 %v681
    %759 = vmatprep.subr.mxu0 %v684
    %760 = vmatpush1.msra.mxu0 %v683
    %761 = vmatprep.subr.mxu0 %v686
    %762 = vmatpush1.msra.mxu0 %v685
    %763 = vmatprep.subr.mxu0 %v688
    %764 = vmatpush1.msra.mxu0 %v687
    %765 = vmatprep.subr.mxu0 %v690
    %766 = vmatpush1.msra.mxu0 %v689
    %767 = vmatprep.subr.mxu0 %v692
    %768 = vmatpush1.msra.mxu0 %v691
    %769 = vmatprep.subr.mxu0 %v694
    %770 = vmatpush1.msra.mxu0 %v693
    %771 = vmatprep.subr.mxu0 %v696
    %772 = vmatpush1.msra.mxu0 %v695
    %773 = vmatprep.subr.mxu0 %v698
    %774 = vmatpush1.msra.mxu0 %v697
    %775 = vmatprep.subr.mxu0 %v700
    %776 = vmatpush1.msra.mxu0 %v699
    %777 = vmatprep.subr.mxu0 %v702
    %778 = vmatpush1.msra.mxu0 %v701
    %779 = vmatprep.subr.mxu0 %v704
    %780 = vmatpush1.msra.mxu0 %v703
    %781 = vmatprep.subr.mxu0 %v706
    %782 = vmatpush1.msra.mxu0 %v705
    %783 = vmatprep.subr.mxu0 %v708
    %784 = vmatpush1.msra.mxu0 %v707
    %785 = vmatprep.subr.mxu0 %v710
    %786 = vmatpush1.msra.mxu0 %v709
    %787 = vmatprep.subr.mxu0 %v712
    %788 = vmatpush1.msra.mxu0 %v711
    %789 = vmatprep.subr.mxu0 %v714
    %790 = vmatpush1.msra.mxu0 %v713
    %791 = vmatprep.subr.mxu0 %v716
    %792 = vmatpush1.msra.mxu0 %v715
    %793 = vmatprep.subr.mxu0 %v718
    %794 = vmatpush1.msra.mxu0 %v717
    %795 = vmatprep.mubr.f32.mxu0 %v652
    %796 = vmatmul.mubr.f32.gmra.mrb[0].mxu0 %v651
    %v797 = vpop.f32.mrb[0].mxu0
    %v798 = vadd.f32 %v724, %v797
    %v799 = vpop.f32.mrb[0].mxu0
    %v800 = vadd.f32 %v728, %v799
    %801 = vmatprep.mubr.f32.mxu0 %v654
    %802 = vmatmul.mubr.f32.gmra.mrb[0].mxu0 %v653
    %v803 = vpop.f32.mrb[0].mxu0
    %v804 = vadd.f32 %v724, %v803
    %v805 = vpop.f32.mrb[0].mxu0
    %v806 = vadd.f32 %v728, %v805
    %807 = vdwg.mxu0
    %808 = vst [vmem:[#allocation17 + $0x10] sm:$0xff] %v798
    %809 = vst [vmem:[#allocation17 + $0x18] sm:$0xff] %v800
    %810 = vst [vmem:[#allocation17 + $0x38] sm:$0xff] %v804
    %811 = vst [vmem:[#allocation17 + $0x40] sm:$0xff] %v806
    %v812 = vld [vmem:[#allocation13] sm:$0xff]
    %v813 = vld [vmem:[#allocation13 + $0x8] sm:$0xff]
    %v814 = vld [vmem:[#allocation13 + $0x10] sm:$0xff]
    %v815 = vld [vmem:[#allocation13 + $0x18] sm:$0xff]
    %v816 = vld [vmem:[#allocation13 + $0x20] sm:$0xff]
    %v817 = vld [vmem:[#allocation13 + $0x28] sm:$0xff]
    %v818 = vld [vmem:[#allocation13 + $0x30] sm:$0xff]
    %v819 = vld [vmem:[#allocation13 + $0x38] sm:$0xff]
    %v820 = vld [vmem:[#allocation13 + $0x40] sm:$0xff]
    %v821 = vld [vmem:[#allocation13 + $0x48] sm:$0xff]
    %v822 = vld [vmem:[#allocation13 + $0x50] sm:$0xff]
    %v823 = vld [vmem:[#allocation13 + $0x58] sm:$0xff]
    %v824 = vld [vmem:[#allocation13 + $0x60] sm:$0xff]
    %v825 = vld [vmem:[#allocation13 + $0x68] sm:$0xff]
    %v826 = vld [vmem:[#allocation13 + $0x70] sm:$0xff]
    %v827 = vld [vmem:[#allocation13 + $0x78] sm:$0xff]
    %v828 = vld [vmem:[#allocation13 + $0x80] sm:$0xff]
    %v829 = vld [vmem:[#allocation13 + $0x88] sm:$0xff]
    %v830 = vld [vmem:[#allocation13 + $0x90] sm:$0xff]
    %v831 = vld [vmem:[#allocation13 + $0x98] sm:$0xff]
    %v832 = vld [vmem:[#allocation13 + $0xa0] sm:$0xff]
    %v833 = vld [vmem:[#allocation13 + $0xa8] sm:$0xff]
    %v834 = vld [vmem:[#allocation13 + $0xb0] sm:$0xff]
    %v835 = vld [vmem:[#allocation13 + $0xb8] sm:$0xff]
    %v836 = vld [vmem:[#allocation13 + $0xc0] sm:$0xff]
    %v837 = vld [vmem:[#allocation13 + $0xc8] sm:$0xff]
    %v838 = vld [vmem:[#allocation13 + $0xd0] sm:$0xff]
    %v839 = vld [vmem:[#allocation13 + $0xd8] sm:$0xff]
    %v840 = vld [vmem:[#allocation13 + $0xe0] sm:$0xff]
    %v841 = vld [vmem:[#allocation13 + $0xe8] sm:$0xff]
    %v842 = vld [vmem:[#allocation13 + $0xf0] sm:$0xff]
    %v843 = vld [vmem:[#allocation13 + $0xf8] sm:$0xff]
    %v844 = vld [vmem:[#allocation13 + $0x100] sm:$0xff]
    %v845 = vld [vmem:[#allocation13 + $0x108] sm:$0xff]
    %v846 = vld [vmem:[#allocation13 + $0x110] sm:$0xff]
    %v847 = vld [vmem:[#allocation13 + $0x118] sm:$0xff]
    %v848 = vld [vmem:[#allocation13 + $0x120] sm:$0xff]
    %v849 = vld [vmem:[#allocation13 + $0x128] sm:$0xff]
    %v850 = vld [vmem:[#allocation13 + $0x130] sm:$0xff]
    %v851 = vld [vmem:[#allocation13 + $0x138] sm:$0xff]
    %v852 = vld [vmem:[#allocation13 + $0x140] sm:$0xff]
    %v853 = vld [vmem:[#allocation13 + $0x148] sm:$0xff]
    %v854 = vld [vmem:[#allocation13 + $0x150] sm:$0xff]
    %v855 = vld [vmem:[#allocation13 + $0x158] sm:$0xff]
    %v856 = vld [vmem:[#allocation13 + $0x160] sm:$0xff]
    %v857 = vld [vmem:[#allocation13 + $0x168] sm:$0xff]
    %v858 = vld [vmem:[#allocation13 + $0x170] sm:$0xff]
    %v859 = vld [vmem:[#allocation13 + $0x178] sm:$0xff]
    %v860 = vld [vmem:[#allocation13 + $0x180] sm:$0xff]
    %v861 = vld [vmem:[#allocation13 + $0x188] sm:$0xff]
    %v862 = vld [vmem:[#allocation13 + $0x190] sm:$0xff]
    %v863 = vld [vmem:[#allocation13 + $0x198] sm:$0xff]
    %v864 = vld [vmem:[#allocation13 + $0x1a0] sm:$0xff]
    %v865 = vld [vmem:[#allocation13 + $0x1a8] sm:$0xff]
    %v866 = vld [vmem:[#allocation13 + $0x1b0] sm:$0xff]
    %v867 = vld [vmem:[#allocation13 + $0x1b8] sm:$0xff]
    %v868 = vld [vmem:[#allocation13 + $0x1c0] sm:$0xff]
    %v869 = vld [vmem:[#allocation13 + $0x1c8] sm:$0xff]
    %v870 = vld [vmem:[#allocation13 + $0x1d0] sm:$0xff]
    %v871 = vld [vmem:[#allocation13 + $0x1d8] sm:$0xff]
    %v872 = vld [vmem:[#allocation13 + $0x1e0] sm:$0xff]
    %v873 = vld [vmem:[#allocation13 + $0x1e8] sm:$0xff]
    %v874 = vld [vmem:[#allocation13 + $0x1f0] sm:$0xff]
    %v875 = vld [vmem:[#allocation13 + $0x1f8] sm:$0xff]
    %v876 = vld [vmem:[%s11] sm:$0x3]
    %v878 = vlaneseq
    %v879 = vshrl.u32 %v878, 7
    %v880 = vsub.s32 0, %v879
    %v881 = vrot.slane %v876, %v880
    %v882 = vlaneseq
    %v883 = vshrl.u32 %v882, 7
    %v884 = vsub.s32 1, %v883
    %v885 = vrot.slane %v876, %v884
    %888 = vmatprep.subr.mxu0 %v813
    %889 = vmatpush1.msra.mxu0 %v812
    %890 = vmatprep.subr.mxu0 %v815
    %891 = vmatpush1.msra.mxu0 %v814
    %892 = vmatprep.subr.mxu0 %v817
    %893 = vmatpush1.msra.mxu0 %v816
    %894 = vmatprep.subr.mxu0 %v819
    %895 = vmatpush1.msra.mxu0 %v818
    %896 = vmatprep.subr.mxu0 %v821
    %897 = vmatpush1.msra.mxu0 %v820
    %898 = vmatprep.subr.mxu0 %v823
    %899 = vmatpush1.msra.mxu0 %v822
    %900 = vmatprep.subr.mxu0 %v825
    %901 = vmatpush1.msra.mxu0 %v824
    %902 = vmatprep.subr.mxu0 %v827
    %903 = vmatpush1.msra.mxu0 %v826
    %904 = vmatprep.subr.mxu0 %v829
    %905 = vmatpush1.msra.mxu0 %v828
    %906 = vmatprep.subr.mxu0 %v831
    %907 = vmatpush1.msra.mxu0 %v830
    %908 = vmatprep.subr.mxu0 %v833
    %909 = vmatpush1.msra.mxu0 %v832
    %910 = vmatprep.subr.mxu0 %v835
    %911 = vmatpush1.msra.mxu0 %v834
    %912 = vmatprep.subr.mxu0 %v837
    %913 = vmatpush1.msra.mxu0 %v836
    %914 = vmatprep.subr.mxu0 %v839
    %915 = vmatpush1.msra.mxu0 %v838
    %916 = vmatprep.subr.mxu0 %v841
    %917 = vmatpush1.msra.mxu0 %v840
    %918 = vmatprep.subr.mxu0 %v843
    %919 = vmatpush1.msra.mxu0 %v842
    %920 = vmatprep.subr.mxu0 %v845
    %921 = vmatpush1.msra.mxu0 %v844
    %922 = vmatprep.subr.mxu0 %v847
    %923 = vmatpush1.msra.mxu0 %v846
    %924 = vmatprep.subr.mxu0 %v849
    %925 = vmatpush1.msra.mxu0 %v848
    %926 = vmatprep.subr.mxu0 %v851
    %927 = vmatpush1.msra.mxu0 %v850
    %928 = vmatprep.subr.mxu0 %v853
    %929 = vmatpush1.msra.mxu0 %v852
    %930 = vmatprep.subr.mxu0 %v855
    %931 = vmatpush1.msra.mxu0 %v854
    %932 = vmatprep.subr.mxu0 %v857
    %933 = vmatpush1.msra.mxu0 %v856
    %934 = vmatprep.subr.mxu0 %v859
    %935 = vmatpush1.msra.mxu0 %v858
    %936 = vmatprep.subr.mxu0 %v861
    %937 = vmatpush1.msra.mxu0 %v860
    %938 = vmatprep.subr.mxu0 %v863
    %939 = vmatpush1.msra.mxu0 %v862
    %940 = vmatprep.subr.mxu0 %v865
    %941 = vmatpush1.msra.mxu0 %v864
    %942 = vmatprep.subr.mxu0 %v867
    %943 = vmatpush1.msra.mxu0 %v866
    %944 = vmatprep.subr.mxu0 %v869
    %945 = vmatpush1.msra.mxu0 %v868
    %946 = vmatprep.subr.mxu0 %v871
    %947 = vmatpush1.msra.mxu0 %v870
    %948 = vmatprep.subr.mxu0 %v873
    %949 = vmatpush1.msra.mxu0 %v872
    %950 = vmatprep.subr.mxu0 %v875
    %951 = vmatpush1.msra.mxu0 %v874
    %952 = vmatprep.mubr.f32.mxu0 %v181
    %953 = vmatmul.mubr.f32.gmra.mrb[0].mxu0 %v180
    %v954 = vpop.f32.mrb[0].mxu0
    %v955 = vadd.f32 %v881, %v954
    %v956 = vpop.f32.mrb[0].mxu0
    %v957 = vadd.f32 %v885, %v956
    %958 = vmatprep.mubr.f32.mxu0 %v183
    %959 = vmatmul.mubr.f32.gmra.mrb[0].mxu0 %v182
    %v960 = vpop.f32.mrb[0].mxu0
    %v961 = vadd.f32 %v881, %v960
    %v962 = vpop.f32.mrb[0].mxu0
    %v963 = vadd.f32 %v885, %v962
    %964 = vdwg.mxu0
    %v965 = vmax.f32 %v955, 0.0
    %v966 = vmax.f32 %v957, 0.0
    %v967 = vmax.f32 %v961, 0.0
    %v968 = vmax.f32 %v963, 0.0
    %v969 = vld [vmem:[#allocation14] sm:$0xff]
    %v970 = vld [vmem:[#allocation14 + $0x8] sm:$0xff]
    %v971 = vld [vmem:[#allocation14 + $0x10] sm:$0xff]
    %v972 = vld [vmem:[#allocation14 + $0x18] sm:$0xff]
    %v973 = vld [vmem:[#allocation14 + $0x20] sm:$0xff]
    %v974 = vld [vmem:[#allocation14 + $0x28] sm:$0xff]
    %v975 = vld [vmem:[#allocation14 + $0x30] sm:$0xff]
    %v976 = vld [vmem:[#allocation14 + $0x38] sm:$0xff]
    %v977 = vld [vmem:[#allocation14 + $0x40] sm:$0xff]
    %v978 = vld [vmem:[#allocation14 + $0x48] sm:$0xff]
    %v979 = vld [vmem:[#allocation14 + $0x50] sm:$0xff]
    %v980 = vld [vmem:[#allocation14 + $0x58] sm:$0xff]
    %v981 = vld [vmem:[#allocation14 + $0x60] sm:$0xff]
    %v982 = vld [vmem:[#allocation14 + $0x68] sm:$0xff]
    %v983 = vld [vmem:[#allocation14 + $0x70] sm:$0xff]
    %v984 = vld [vmem:[#allocation14 + $0x78] sm:$0xff]
    %v985 = vld [vmem:[#allocation14 + $0x80] sm:$0xff]
    %v986 = vld [vmem:[#allocation14 + $0x88] sm:$0xff]
    %v987 = vld [vmem:[#allocation14 + $0x90] sm:$0xff]
    %v988 = vld [vmem:[#allocation14 + $0x98] sm:$0xff]
    %v989 = vld [vmem:[#allocation14 + $0xa0] sm:$0xff]
    %v990 = vld [vmem:[#allocation14 + $0xa8] sm:$0xff]
    %v991 = vld [vmem:[#allocation14 + $0xb0] sm:$0xff]
    %v992 = vld [vmem:[#allocation14 + $0xb8] sm:$0xff]
    %v993 = vld [vmem:[#allocation14 + $0xc0] sm:$0xff]
    %v994 = vld [vmem:[#allocation14 + $0xc8] sm:$0xff]
    %v995 = vld [vmem:[#allocation14 + $0xd0] sm:$0xff]
    %v996 = vld [vmem:[#allocation14 + $0xd8] sm:$0xff]
    %v997 = vld [vmem:[#allocation14 + $0xe0] sm:$0xff]
    %v998 = vld [vmem:[#allocation14 + $0xe8] sm:$0xff]
    %v999 = vld [vmem:[#allocation14 + $0xf0] sm:$0xff]
    %v1000 = vld [vmem:[#allocation14 + $0xf8] sm:$0xff]
    %v1001 = vld [vmem:[#allocation14 + $0x100] sm:$0xff]
    %v1002 = vld [vmem:[#allocation14 + $0x108] sm:$0xff]
    %v1003 = vld [vmem:[#allocation14 + $0x110] sm:$0xff]
    %v1004 = vld [vmem:[#allocation14 + $0x118] sm:$0xff]
    %v1005 = vld [vmem:[#allocation14 + $0x120] sm:$0xff]
    %v1006 = vld [vmem:[#allocation14 + $0x128] sm:$0xff]
    %v1007 = vld [vmem:[#allocation14 + $0x130] sm:$0xff]
    %v1008 = vld [vmem:[#allocation14 + $0x138] sm:$0xff]
    %v1009 = vld [vmem:[#allocation14 + $0x140] sm:$0xff]
    %v1010 = vld [vmem:[#allocation14 + $0x148] sm:$0xff]
    %v1011 = vld [vmem:[#allocation14 + $0x150] sm:$0xff]
    %v1012 = vld [vmem:[#allocation14 + $0x158] sm:$0xff]
    %v1013 = vld [vmem:[#allocation14 + $0x160] sm:$0xff]
    %v1014 = vld [vmem:[#allocation14 + $0x168] sm:$0xff]
    %v1015 = vld [vmem:[#allocation14 + $0x170] sm:$0xff]
    %v1016 = vld [vmem:[#allocation14 + $0x178] sm:$0xff]
    %v1017 = vld [vmem:[#allocation14 + $0x180] sm:$0xff]
    %v1018 = vld [vmem:[#allocation14 + $0x188] sm:$0xff]
    %v1019 = vld [vmem:[#allocation14 + $0x190] sm:$0xff]
    %v1020 = vld [vmem:[#allocation14 + $0x198] sm:$0xff]
    %v1021 = vld [vmem:[#allocation14 + $0x1a0] sm:$0xff]
    %v1022 = vld [vmem:[#allocation14 + $0x1a8] sm:$0xff]
    %v1023 = vld [vmem:[#allocation14 + $0x1b0] sm:$0xff]
    %v1024 = vld [vmem:[#allocation14 + $0x1b8] sm:$0xff]
    %v1025 = vld [vmem:[#allocation14 + $0x1c0] sm:$0xff]
    %v1026 = vld [vmem:[#allocation14 + $0x1c8] sm:$0xff]
    %v1027 = vld [vmem:[#allocation14 + $0x1d0] sm:$0xff]
    %v1028 = vld [vmem:[#allocation14 + $0x1d8] sm:$0xff]
    %v1029 = vld [vmem:[#allocation14 + $0x1e0] sm:$0xff]
    %v1030 = vld [vmem:[#allocation14 + $0x1e8] sm:$0xff]
    %v1031 = vld [vmem:[#allocation14 + $0x1f0] sm:$0xff]
    %v1032 = vld [vmem:[#allocation14 + $0x1f8] sm:$0xff]
    %v1033 = vld [vmem:[%s13] sm:$0x3]
    %v1035 = vlaneseq
    %v1036 = vshrl.u32 %v1035, 7
    %v1037 = vsub.s32 0, %v1036
    %v1038 = vrot.slane %v1033, %v1037
    %v1039 = vlaneseq
    %v1040 = vshrl.u32 %v1039, 7
    %v1041 = vsub.s32 1, %v1040
    %v1042 = vrot.slane %v1033, %v1041
    %1045 = vmatprep.subr.mxu0 %v970
    %1046 = vmatpush1.msra.mxu0 %v969
    %1047 = vmatprep.subr.mxu0 %v972
    %1048 = vmatpush1.msra.mxu0 %v971
    %1049 = vmatprep.subr.mxu0 %v974
    %1050 = vmatpush1.msra.mxu0 %v973
    %1051 = vmatprep.subr.mxu0 %v976
    %1052 = vmatpush1.msra.mxu0 %v975
    %1053 = vmatprep.subr.mxu0 %v978
    %1054 = vmatpush1.msra.mxu0 %v977
    %1055 = vmatprep.subr.mxu0 %v980
    %1056 = vmatpush1.msra.mxu0 %v979
    %1057 = vmatprep.subr.mxu0 %v982
    %1058 = vmatpush1.msra.mxu0 %v981
    %1059 = vmatprep.subr.mxu0 %v984
    %1060 = vmatpush1.msra.mxu0 %v983
    %1061 = vmatprep.subr.mxu0 %v986
    %1062 = vmatpush1.msra.mxu0 %v985
    %1063 = vmatprep.subr.mxu0 %v988
    %1064 = vmatpush1.msra.mxu0 %v987
    %1065 = vmatprep.subr.mxu0 %v990
    %1066 = vmatpush1.msra.mxu0 %v989
    %1067 = vmatprep.subr.mxu0 %v992
    %1068 = vmatpush1.msra.mxu0 %v991
    %1069 = vmatprep.subr.mxu0 %v994
    %1070 = vmatpush1.msra.mxu0 %v993
    %1071 = vmatprep.subr.mxu0 %v996
    %1072 = vmatpush1.msra.mxu0 %v995
    %1073 = vmatprep.subr.mxu0 %v998
    %1074 = vmatpush1.msra.mxu0 %v997
    %1075 = vmatprep.subr.mxu0 %v1000
    %1076 = vmatpush1.msra.mxu0 %v999
    %1077 = vmatprep.subr.mxu0 %v1002
    %1078 = vmatpush1.msra.mxu0 %v1001
    %1079 = vmatprep.subr.mxu0 %v1004
    %1080 = vmatpush1.msra.mxu0 %v1003
    %1081 = vmatprep.subr.mxu0 %v1006
    %1082 = vmatpush1.msra.mxu0 %v1005
    %1083 = vmatprep.subr.mxu0 %v1008
    %1084 = vmatpush1.msra.mxu0 %v1007
    %1085 = vmatprep.subr.mxu0 %v1010
    %1086 = vmatpush1.msra.mxu0 %v1009
    %1087 = vmatprep.subr.mxu0 %v1012
    %1088 = vmatpush1.msra.mxu0 %v1011
    %1089 = vmatprep.subr.mxu0 %v1014
    %1090 = vmatpush1.msra.mxu0 %v1013
    %1091 = vmatprep.subr.mxu0 %v1016
    %1092 = vmatpush1.msra.mxu0 %v1015
    %1093 = vmatprep.subr.mxu0 %v1018
    %1094 = vmatpush1.msra.mxu0 %v1017
    %1095 = vmatprep.subr.mxu0 %v1020
    %1096 = vmatpush1.msra.mxu0 %v1019
    %1097 = vmatprep.subr.mxu0 %v1022
    %1098 = vmatpush1.msra.mxu0 %v1021
    %1099 = vmatprep.subr.mxu0 %v1024
    %1100 = vmatpush1.msra.mxu0 %v1023
    %1101 = vmatprep.subr.mxu0 %v1026
    %1102 = vmatpush1.msra.mxu0 %v1025
    %1103 = vmatprep.subr.mxu0 %v1028
    %1104 = vmatpush1.msra.mxu0 %v1027
    %1105 = vmatprep.subr.mxu0 %v1030
    %1106 = vmatpush1.msra.mxu0 %v1029
    %1107 = vmatprep.subr.mxu0 %v1032
    %1108 = vmatpush1.msra.mxu0 %v1031
    %1109 = vmatprep.mubr.f32.mxu0 %v966
    %1110 = vmatmul.mubr.f32.gmra.mrb[0].mxu0 %v965
    %v1111 = vpop.f32.mrb[0].mxu0
    %v1112 = vadd.f32 %v1038, %v1111
    %v1113 = vpop.f32.mrb[0].mxu0
    %v1114 = vadd.f32 %v1042, %v1113
    %1115 = vmatprep.mubr.f32.mxu0 %v968
    %1116 = vmatmul.mubr.f32.gmra.mrb[0].mxu0 %v967
    %v1117 = vpop.f32.mrb[0].mxu0
    %v1118 = vadd.f32 %v1038, %v1117
    %v1119 = vpop.f32.mrb[0].mxu0
    %v1120 = vadd.f32 %v1042, %v1119
    %1121 = vdwg.mxu0
    %v1122 = vmax.f32 %v1112, 0.0
    %v1123 = vmax.f32 %v1114, 0.0
    %v1124 = vmax.f32 %v1118, 0.0
    %v1125 = vmax.f32 %v1120, 0.0
    %v1126 = vld [vmem:[#allocation16] sm:$0xff]
    %v1127 = vld [vmem:[#allocation16 + $0x8] sm:$0xff]
    %v1128 = vld [vmem:[#allocation16 + $0x10] sm:$0xff]
    %v1129 = vld [vmem:[#allocation16 + $0x18] sm:$0xff]
    %v1130 = vld [vmem:[#allocation16 + $0x20] sm:$0xff]
    %v1131 = vld [vmem:[#allocation16 + $0x28] sm:$0xff]
    %v1132 = vld [vmem:[#allocation16 + $0x30] sm:$0xff]
    %v1133 = vld [vmem:[#allocation16 + $0x38] sm:$0xff]
    %v1134 = vld [vmem:[#allocation16 + $0x40] sm:$0xff]
    %v1135 = vld [vmem:[#allocation16 + $0x48] sm:$0xff]
    %v1136 = vld [vmem:[#allocation16 + $0x50] sm:$0xff]
    %v1137 = vld [vmem:[#allocation16 + $0x58] sm:$0xff]
    %v1138 = vld [vmem:[#allocation16 + $0x60] sm:$0xff]
    %v1139 = vld [vmem:[#allocation16 + $0x68] sm:$0xff]
    %v1140 = vld [vmem:[#allocation16 + $0x70] sm:$0xff]
    %v1141 = vld [vmem:[#allocation16 + $0x78] sm:$0xff]
    %v1142 = vld [vmem:[#allocation16 + $0x80] sm:$0xff]
    %v1143 = vld [vmem:[#allocation16 + $0x88] sm:$0xff]
    %v1144 = vld [vmem:[#allocation16 + $0x90] sm:$0xff]
    %v1145 = vld [vmem:[#allocation16 + $0x98] sm:$0xff]
    %v1146 = vld [vmem:[#allocation16 + $0xa0] sm:$0xff]
    %v1147 = vld [vmem:[#allocation16 + $0xa8] sm:$0xff]
    %v1148 = vld [vmem:[#allocation16 + $0xb0] sm:$0xff]
    %v1149 = vld [vmem:[#allocation16 + $0xb8] sm:$0xff]
    %v1150 = vld [vmem:[#allocation16 + $0xc0] sm:$0xff]
    %v1151 = vld [vmem:[#allocation16 + $0xc8] sm:$0xff]
    %v1152 = vld [vmem:[#allocation16 + $0xd0] sm:$0xff]
    %v1153 = vld [vmem:[#allocation16 + $0xd8] sm:$0xff]
    %v1154 = vld [vmem:[#allocation16 + $0xe0] sm:$0xff]
    %v1155 = vld [vmem:[#allocation16 + $0xe8] sm:$0xff]
    %v1156 = vld [vmem:[#allocation16 + $0xf0] sm:$0xff]
    %v1157 = vld [vmem:[#allocation16 + $0xf8] sm:$0xff]
    %v1158 = vld [vmem:[%s15] sm:$0x1]
    %v1160 = vlaneseq
    %v1161 = vshrl.u32 %v1160, 7
    %v1162 = vsub.s32 0, %v1161
    %v1163 = vrot.slane %v1158, %v1162
    %1165 = vmatprep.subr.mxu0 0.0
    %1166 = vmatpush1.msra.mxu0 %v1126
    %1167 = vmatprep.subr.mxu0 0.0
    %1168 = vmatpush1.msra.mxu0 %v1127
    %1169 = vmatprep.subr.mxu0 0.0
    %1170 = vmatpush1.msra.mxu0 %v1128
    %1171 = vmatprep.subr.mxu0 0.0
    %1172 = vmatpush1.msra.mxu0 %v1129
    %1173 = vmatprep.subr.mxu0 0.0
    %1174 = vmatpush1.msra.mxu0 %v1130
    %1175 = vmatprep.subr.mxu0 0.0
    %1176 = vmatpush1.msra.mxu0 %v1131
    %1177 = vmatprep.subr.mxu0 0.0
    %1178 = vmatpush1.msra.mxu0 %v1132
    %1179 = vmatprep.subr.mxu0 0.0
    %1180 = vmatpush1.msra.mxu0 %v1133
    %1181 = vmatprep.subr.mxu0 0.0
    %1182 = vmatpush1.msra.mxu0 %v1134
    %1183 = vmatprep.subr.mxu0 0.0
    %1184 = vmatpush1.msra.mxu0 %v1135
    %1185 = vmatprep.subr.mxu0 0.0
    %1186 = vmatpush1.msra.mxu0 %v1136
    %1187 = vmatprep.subr.mxu0 0.0
    %1188 = vmatpush1.msra.mxu0 %v1137
    %1189 = vmatprep.subr.mxu0 0.0
    %1190 = vmatpush1.msra.mxu0 %v1138
    %1191 = vmatprep.subr.mxu0 0.0
    %1192 = vmatpush1.msra.mxu0 %v1139
    %1193 = vmatprep.subr.mxu0 0.0
    %1194 = vmatpush1.msra.mxu0 %v1140
    %1195 = vmatprep.subr.mxu0 0.0
    %1196 = vmatpush1.msra.mxu0 %v1141
    %1197 = vmatprep.subr.mxu0 0.0
    %1198 = vmatpush1.msra.mxu0 %v1142
    %1199 = vmatprep.subr.mxu0 0.0
    %1200 = vmatpush1.msra.mxu0 %v1143
    %1201 = vmatprep.subr.mxu0 0.0
    %1202 = vmatpush1.msra.mxu0 %v1144
    %1203 = vmatprep.subr.mxu0 0.0
    %1204 = vmatpush1.msra.mxu0 %v1145
    %1205 = vmatprep.subr.mxu0 0.0
    %1206 = vmatpush1.msra.mxu0 %v1146
    %1207 = vmatprep.subr.mxu0 0.0
    %1208 = vmatpush1.msra.mxu0 %v1147
    %1209 = vmatprep.subr.mxu0 0.0
    %1210 = vmatpush1.msra.mxu0 %v1148
    %1211 = vmatprep.subr.mxu0 0.0
    %1212 = vmatpush1.msra.mxu0 %v1149
    %1213 = vmatprep.subr.mxu0 0.0
    %1214 = vmatpush1.msra.mxu0 %v1150
    %1215 = vmatprep.subr.mxu0 0.0
    %1216 = vmatpush1.msra.mxu0 %v1151
    %1217 = vmatprep.subr.mxu0 0.0
    %1218 = vmatpush1.msra.mxu0 %v1152
    %1219 = vmatprep.subr.mxu0 0.0
    %1220 = vmatpush1.msra.mxu0 %v1153
    %1221 = vmatprep.subr.mxu0 0.0
    %1222 = vmatpush1.msra.mxu0 %v1154
    %1223 = vmatprep.subr.mxu0 0.0
    %1224 = vmatpush1.msra.mxu0 %v1155
    %1225 = vmatprep.subr.mxu0 0.0
    %1226 = vmatpush1.msra.mxu0 %v1156
    %1227 = vmatprep.subr.mxu0 0.0
    %1228 = vmatpush1.msra.mxu0 %v1157
    %1229 = vmatprep.mubr.f32.mxu0 %v1123
    %1230 = vmatmul.mubr.f32.gmra.mrb[0].mxu0 %v1122
    %v1231 = vpop.f32.mrb[0].mxu0
    %v1232 = vadd.f32 %v1163, %v1231
    %v1233 = vpop.f32.mrb[0].mxu0
    %1234 = vmatprep.mubr.f32.mxu0 %v1125
    %1235 = vmatmul.mubr.f32.gmra.mrb[0].mxu0 %v1124
    %v1236 = vpop.f32.mrb[0].mxu0
    %v1237 = vadd.f32 %v1163, %v1236
    %v1238 = vpop.f32.mrb[0].mxu0
    %1239 = vdwg.mxu0
    %1240 = vst [vmem:[#allocation17 + $0x20] sm:$0xff] %v1232
    %1241 = vst [vmem:[#allocation17 + $0x48] sm:$0xff] %v1237
    // Predicated region
    $region102: #{tpu_custom_call.1} parent=1 // pred_check
      _
    $region103: #{tpu_custom_call.1} parent=1 // pred_check_branch
      %1243 = sbr.rel (0) target = $region105
    $region104: #{tpu_custom_call.1} parent=1 // pred_region
      %s1245 = ssub.s32 1280, 1280
      %1246 = vsyncadd [#allocation4], %s1245
      %s1247 = sshll.u32 [#allocation17], 4
      %s1248 = int_to_ptr.vmem [resolvable:$true] %s1247
      %1253 = dma.vmem_to_hbm [thread:$0]  %s1248, 1280, %s16, [#allocation4], 640, 640, 40
    $region105: #{tpu_custom_call.1} parent=1 // pred_fallthru
      _
    // Predicated region
    $region106: #{tpu_custom_call.1} parent=1 // pred_check
      _
    $region107: #{tpu_custom_call.1} parent=1 // pred_check_branch
      %1255 = sbr.rel (0) target = $region109
    $region108: #{tpu_custom_call.1} parent=1 // pred_region
      %1256 = dma.done [#allocation4], 1280
    $region109: #{tpu_custom_call.1} parent=1 // pred_fallthru
      _
    %1257 = vsyncpa [#allocation3], 1
    %1258 = vsyncpa [#allocation6], 1
    %1259 = vsyncpa [#allocation9], 1
    %1260 = vsyncpa [#allocation12], 1
    %1261 = vsyncpa [#allocation15], 1
    %1262 = vsyncpa [#allocation4], 1

</llo_original>
